<compile_context>
chip_gen: v7x
topology: tpu7x:2x2x1
jax: 0.10.0
libtpu: 0.0.40
codegen_flags: <defaults>
</compile_context>

<pallas_src>
import functools

import jax
import jax.numpy as jnp
from jax.experimental import pallas as pl
from jax.experimental.pallas import tpu as pltpu


# --------------------------------------------------------------------------- #
# Pass 1: hw = relu(A @ (x * W1) + b1) @ W2         (grid: rows of A x k-tiles)
# --------------------------------------------------------------------------- #
def _gcn_layer1_kernel(a_ref, x_ref, w1_ref, b1_ref, w2t_ref, hw_ref, acc_ref):
    k = pl.program_id(1)

    @pl.when(k == 0)
    def _init():
        acc_ref[...] = jnp.zeros_like(acc_ref)

    # (x_k @ W1) with K == 1 is an outer-product broadcast -> VPU, not MXU.
    xw = (x_ref[...].astype(jnp.float32) * w1_ref[...]).astype(jnp.bfloat16)  # [bk,16]
    # A tile (bf16) @ xw (bf16) with f32 accumulation on the MXU.
    acc_ref[...] += jnp.dot(a_ref[...], xw, preferred_element_type=jnp.float32)

    @pl.when(k == pl.num_programs(1) - 1)
    def _finalize():
        h = jnp.maximum(acc_ref[...] + b1_ref[...], 0.0)                 # [bm,16]
        # H @ W2 ([bm,16]@[16,1]) as VPU mul + lane reduce: keeps the MXU free and
        # avoids a 1-lane-wide MXU result; only written once per row tile.
        hw_ref[...] = jnp.sum(h * w2t_ref[...], axis=-1, keepdims=True)  # [bm,1]


# --------------------------------------------------------------------------- #
# Pass 2: out = A @ hw + b2  (no symmetry assumption) (grid: rows of A x k-tiles)
# --------------------------------------------------------------------------- #
def _gcn_layer2_kernel(a_ref, hw_ref, b2_ref, out_ref):
    k = pl.program_id(1)

    # Output block is resident across the (arbitrary) k axis -> accumulate in place.
    @pl.when(k == 0)
    def _init():
        out_ref[...] = jnp.zeros_like(out_ref)

    # [bm,bk] bf16 @ [bk,1] bf16 -> f32.  Mem-bound; MXU work hidden under the A DMA.
    out_ref[...] += jnp.dot(a_ref[...], hw_ref[...],
                            preferred_element_type=jnp.float32)

    @pl.when(k == pl.num_programs(1) - 1)
    def _finalize():
        out_ref[...] += b2_ref[0, 0]          # b2 is an SMEM scalar


def _pick_block(n, preferred):
    """Largest multiple of 128 that is <= preferred and divides n, else n (untiled)."""
    if n <= preferred:
        return n
    start = preferred - preferred % 128
    for b in range(start, 127, -128):
        if n % b == 0:
            return b
    return n


@functools.partial(jax.jit, static_argnames=("bm", "bk"))
def gcn_forward(a_norm, x, w1, b1, w2, b2, *, bm=512, bk=512):
    """Fused 2-layer GCN forward on TPU.

    a_norm: [N, N] GCN-normalized adjacency (need not be symmetric), float32.
    x:      [N, 1] node features.
    w1, b1: GCNConv(1, 16) weight [1, 16] / bias [1, 16].
    w2, b2: GCNConv(16, 1) weight [16, 1] / bias [1, 1].
    """
    n = x.shape[0]
    f_hidden = w1.shape[1]
    bm = _pick_block(n, bm)
    bk = _pick_block(n, bk)

    # bf16 for the O(N^2) operand (and x); f32 accumulation inside the kernels.
    a_bf16 = a_norm.astype(jnp.bfloat16)
    x_bf16 = x.astype(jnp.bfloat16)
    w1 = w1.astype(jnp.float32).reshape(1, f_hidden)
    b1 = b1.astype(jnp.float32).reshape(1, f_hidden)
    w2t = w2.astype(jnp.float32).reshape(1, f_hidden)   # [16,1] -> [1,16]
    b2 = b2.astype(jnp.float32).reshape(1, 1)

    cparams = pltpu.CompilerParams(
        dimension_semantics=("parallel", "arbitrary"))
    # NOTE: 512x512 bf16 A tiles double-buffered = ~1 MiB -> comfortably inside the
    # default scoped VMEM limit on v5e/v6e/v7x; no vmem_limit_bytes override needed.

    # ---- pass 1: hw = relu(A @ (x*W1) + b1) @ W2 ------------------------- [N, 1]
    hw = pl.pallas_call(
        _gcn_layer1_kernel,
        out_shape=jax.ShapeDtypeStruct((n, 1), jnp.float32),
        grid=(n // bm, n // bk),
        in_specs=[
            pl.BlockSpec((bm, bk), lambda i, k: (i, k)),            # A tile (bf16)
            pl.BlockSpec((bk, 1), lambda i, k: (k, 0)),             # x tile (bf16)
            pl.BlockSpec(memory_space=pltpu.MemorySpace.VMEM),      # w1   [1,16]
            pl.BlockSpec(memory_space=pltpu.MemorySpace.VMEM),      # b1   [1,16]
            pl.BlockSpec(memory_space=pltpu.MemorySpace.VMEM),      # w2^T [1,16]
        ],
        out_specs=pl.BlockSpec((bm, 1), lambda i, k: (i, 0)),
        scratch_shapes=[pltpu.VMEM((bm, f_hidden), jnp.float32)],
        compiler_params=cparams,
        cost_estimate=pl.CostEstimate(
            flops=2 * n * n * f_hidden,
            transcendentals=0,
            bytes_accessed=n * n * 2 + n * 2 + n * 4 + 3 * f_hidden * 4),
    )(a_bf16, x_bf16, w1, b1, w2t)

    # ---- pass 2: out = A @ hw + b2  (accumulates in the resident output block) ----
    hw_bf16 = hw.astype(jnp.bfloat16)
    out = pl.pallas_call(
        _gcn_layer2_kernel,
        out_shape=jax.ShapeDtypeStruct((n, 1), jnp.float32),
        grid=(n // bm, n // bk),
        in_specs=[
            pl.BlockSpec((bm, bk), lambda i, k: (i, k)),            # A tile (bf16)
            pl.BlockSpec((bk, 1), lambda i, k: (k, 0)),             # hw tile (bf16)
            pl.BlockSpec(memory_space=pltpu.MemorySpace.SMEM),      # b2 scalar
        ],
        out_specs=pl.BlockSpec((bm, 1), lambda i, k: (i, 0)),
        compiler_params=cparams,
        cost_estimate=pl.CostEstimate(
            flops=2 * n * n,
            transcendentals=0,
            bytes_accessed=n * n * 2 + n * 2 + n * 4 + 4),
    )(a_bf16, hw_bf16, b2)

    return out


def build_norm_adj(edge_index, num_nodes):
    """Plain-JAX glue: dense GCN-normalized adjacency D^{-1/2} (A + I) D^{-1/2}.

    Note: assumes edge_index has no explicit self-loops and no duplicate edges
    (matches the test graph); PyG's gcn_norm scatter-add would differ otherwise.
    """
    src, dst = edge_index[0], edge_index[1]
    a = jnp.zeros((num_nodes, num_nodes), jnp.float32)
    a = a.at[dst, src].set(1.0)                       # message flows src -> dst
    a = a + jnp.eye(num_nodes, dtype=jnp.float32)     # add self loops
    deg = a.sum(axis=1)
    dinv = jnp.where(deg > 0, 1.0 / jnp.sqrt(deg), 0.0)
    return dinv[:, None] * a * dinv[None, :]


if __name__ == "__main__":
    key = jax.random.PRNGKey(0)
    N = 512  # number of graph nodes (multiple of 128 so the kernel grid is exercised)

    # Deterministic undirected ring graph: edge_index shape [2, 2N]
    idx = jnp.arange(N)
    src = jnp.concatenate([idx, (idx + 1) % N])
    dst = jnp.concatenate([(idx + 1) % N, idx])
    edge_index = jnp.stack([src, dst]).astype(jnp.int32)

    k_x, k_w1, k_w2 = jax.random.split(key, 3)
    x = jax.random.normal(k_x, (N, 1), jnp.float32)                     # data.x: [N, 1]
    # Deterministic glorot-uniform-style weights; biases zero (PyG default init).
    w1 = jax.random.uniform(k_w1, (1, 16), jnp.float32, -0.59, 0.59)    # GCNConv(1, 16)
    b1 = jnp.zeros((1, 16), jnp.float32)
    w2 = jax.random.uniform(k_w2, (16, 1), jnp.float32, -0.59, 0.59)    # GCNConv(16, 1)
    b2 = jnp.zeros((1, 1), jnp.float32)

    a_norm = build_norm_adj(edge_index, N)

    # 256-sized blocks -> 2x2 grid per pass (also keeps the v6e 256x256 MXU full).
    out = gcn_forward(a_norm, x, w1, b1, w2, b2, bm=256, bk=256)
    out = jax.block_until_ready(out)
    assert out.shape == (N, 1)

    # Pure-JAX f32 reference (kernel streams A/x/hw in bf16 -> loosened tolerance).
    ref = a_norm @ jnp.maximum(a_norm @ (x * w1) + b1, 0.0) @ w2 + b2
    max_err = jnp.max(jnp.abs(out - ref))
    assert jnp.allclose(out, ref, atol=5e-2, rtol=2e-2), f"mismatch, max err {max_err}"

    print("KERNEL_OK")
</pallas_src>

<mosaic_0001>
module attributes {stable_mosaic.version = 11 : i64} {
  func.func @_gcn_layer1_kernel(%arg0: i32, %arg1: i32, %arg2: memref<256x256xbf16, #tpu.memory_space<vmem>>, %arg3: memref<256x1xbf16, #tpu.memory_space<vmem>>, %arg4: memref<1x16xf32, #tpu.memory_space<vmem>>, %arg5: memref<1x16xf32, #tpu.memory_space<vmem>>, %arg6: memref<1x16xf32, #tpu.memory_space<vmem>>, %arg7: memref<256x1xf32, #tpu.memory_space<vmem>>, %arg8: memref<256x16xf32, #tpu.memory_space<vmem>>) attributes {dimension_semantics = [#tpu.dimension_semantics<parallel>, #tpu.dimension_semantics<arbitrary>], iteration_bounds = array<i64: 2, 2>, scalar_prefetch = 0 : i64, scratch_operands = 1 : i64, tpu.core_type = #tpu.core_type<tc>, window_params = [{transform_indices = @transform_0, window_bounds = array<i64: 256, 256>}, {transform_indices = @transform_1, window_bounds = array<i64: 256, 1>}, {pipeline_mode = #tpu.pipeline_mode<synchronous>, transform_indices = @transform_2, window_bounds = array<i64: 1, 16>}, {pipeline_mode = #tpu.pipeline_mode<synchronous>, transform_indices = @transform_3, window_bounds = array<i64: 1, 16>}, {pipeline_mode = #tpu.pipeline_mode<synchronous>, transform_indices = @transform_4, window_bounds = array<i64: 1, 16>}, {transform_indices = @transform_5, window_bounds = array<i64: 256, 1>}]} {
    %c0_i32 = arith.constant 0 : i32
    %0 = arith.cmpi eq, %arg1, %c0_i32 : i32
    %1 = arith.extui %0 : i1 to i32
    %c0_i32_0 = arith.constant 0 : i32
    %2 = arith.cmpi ne, %1, %c0_i32_0 : i32
    scf.if %2 {
      %cst_11 = arith.constant 0.000000e+00 : f32
      %18 = vector.broadcast %cst_11 : f32 to vector<256x16xf32>
      %c0_12 = arith.constant 0 : index
      %c0_13 = arith.constant 0 : index
      %19 = vector.load %arg8[%c0_12, %c0_13] : memref<256x16xf32, #tpu.memory_space<vmem>>, vector<256x16xf32>
      tpu.vector_store %arg8[%c0_12, %c0_13], %18 {strides = array<i32>} : memref<256x16xf32, #tpu.memory_space<vmem>>, vector<256x16xf32>,
    } else {
    }
    %c0 = arith.constant 0 : index
    %c0_1 = arith.constant 0 : index
    %3 = vector.load %arg3[%c0, %c0_1] : memref<256x1xbf16, #tpu.memory_space<vmem>>, vector<256x1xbf16>
    %4 = arith.extf %3 : vector<256x1xbf16> to vector<256x1xf32>
    %c0_2 = arith.constant 0 : index
    %c0_3 = arith.constant 0 : index
    %5 = vector.load %arg4[%c0_2, %c0_3] : memref<1x16xf32, #tpu.memory_space<vmem>>, vector<1x16xf32>
    %6 = vector.broadcast %4 : vector<256x1xf32> to vector<256x16xf32>
    %7 = vector.broadcast %5 : vector<1x16xf32> to vector<256x16xf32>
    %8 = arith.mulf %6, %7 : vector<256x16xf32>
    %9 = arith.truncf %8 : vector<256x16xf32> to vector<256x16xbf16>
    %c0_4 = arith.constant 0 : index
    %c0_5 = arith.constant 0 : index
    %10 = vector.load %arg8[%c0_4, %c0_5] : memref<256x16xf32, #tpu.memory_space<vmem>>, vector<256x16xf32>
    %c0_6 = arith.constant 0 : index
    %c0_7 = arith.constant 0 : index
    %11 = vector.load %arg2[%c0_6, %c0_7] : memref<256x256xbf16, #tpu.memory_space<vmem>>, vector<256x256xbf16>
    %cst = arith.constant dense<0.000000e+00> : vector<256x16xf32>
    %12 = tpu.matmul %11, %9, %cst {dimension_numbers = #tpu.dot_dimension_numbers<[1], [0], [0], [1], [0, 0, 1, 1], [], []>} : vector<256x256xbf16>, vector<256x16xbf16>, vector<256x16xf32> -> vector<256x16xf32>
    %13 = arith.addf %10, %12 : vector<256x16xf32>
    %c0_8 = arith.constant 0 : index
    %c0_9 = arith.constant 0 : index
    %14 = vector.load %arg8[%c0_8, %c0_9] : memref<256x16xf32, #tpu.memory_space<vmem>>, vector<256x16xf32>
    tpu.vector_store %arg8[%c0_8, %c0_9], %13 {strides = array<i32>} : memref<256x16xf32, #tpu.memory_space<vmem>>, vector<256x16xf32>,
    %c1_i32 = arith.constant 1 : i32
    %15 = arith.cmpi eq, %arg1, %c1_i32 : i32
    %16 = arith.extui %15 : i1 to i32
    %c0_i32_10 = arith.constant 0 : i32
    %17 = arith.cmpi ne, %16, %c0_i32_10 : i32
    scf.if %17 {
      %c0_11 = arith.constant 0 : index
      %c0_12 = arith.constant 0 : index
      %18 = vector.load %arg8[%c0_11, %c0_12] : memref<256x16xf32, #tpu.memory_space<vmem>>, vector<256x16xf32>
      %c0_13 = arith.constant 0 : index
      %c0_14 = arith.constant 0 : index
      %19 = vector.load %arg5[%c0_13, %c0_14] : memref<1x16xf32, #tpu.memory_space<vmem>>, vector<1x16xf32>
      %20 = vector.broadcast %19 : vector<1x16xf32> to vector<256x16xf32>
      %21 = arith.addf %18, %20 : vector<256x16xf32>
      %cst_15 = arith.constant 0.000000e+00 : f32
      %22 = vector.broadcast %cst_15 : f32 to vector<256x16xf32>
      %23 = arith.maximumf %21, %22 : vector<256x16xf32>
      %c0_16 = arith.constant 0 : index
      %c0_17 = arith.constant 0 : index
      %24 = vector.load %arg6[%c0_16, %c0_17] : memref<1x16xf32, #tpu.memory_space<vmem>>, vector<1x16xf32>
      %25 = vector.broadcast %24 : vector<1x16xf32> to vector<256x16xf32>
      %26 = arith.mulf %23, %25 : vector<256x16xf32>
      %cst_18 = arith.constant dense<0.000000e+00> : vector<256xf32>
      %27 = vector.multi_reduction <add>, %26, %cst_18 [1] : vector<256x16xf32> to vector<256xf32>
      %28 = vector.shape_cast %27 : vector<256xf32> to vector<256x1xf32>
      %c0_19 = arith.constant 0 : index
      %c0_20 = arith.constant 0 : index
      %29 = vector.load %arg7[%c0_19, %c0_20] : memref<256x1xf32, #tpu.memory_space<vmem>>, vector<256x1xf32>
      tpu.vector_store %arg7[%c0_19, %c0_20], %28 {strides = array<i32>} : memref<256x1xf32, #tpu.memory_space<vmem>>, vector<256x1xf32>,
    } else {
    }
    return
  }
  func.func @transform_0(%arg0: i32, %arg1: i32) -> (i32, i32) {
    %c0_i32 = arith.constant 0 : i32
    return %arg0, %arg1 : i32, i32
  }
  func.func @transform_1(%arg0: i32, %arg1: i32) -> (i32, i32) {
    %c0_i32 = arith.constant 0 : i32
    %c0_i32_0 = arith.constant 0 : i32
    return %arg1, %c0_i32 : i32, i32
  }
  func.func @transform_2(%arg0: i32, %arg1: i32) -> (i32, i32) {
    %c0_i32 = arith.constant 0 : i32
    %c0_i32_0 = arith.constant 0 : i32
    %c0_i32_1 = arith.constant 0 : i32
    return %c0_i32, %c0_i32_0 : i32, i32
  }
  func.func @transform_3(%arg0: i32, %arg1: i32) -> (i32, i32) {
    %c0_i32 = arith.constant 0 : i32
    %c0_i32_0 = arith.constant 0 : i32
    %c0_i32_1 = arith.constant 0 : i32
    return %c0_i32, %c0_i32_0 : i32, i32
  }
  func.func @transform_4(%arg0: i32, %arg1: i32) -> (i32, i32) {
    %c0_i32 = arith.constant 0 : i32
    %c0_i32_0 = arith.constant 0 : i32
    %c0_i32_1 = arith.constant 0 : i32
    return %c0_i32, %c0_i32_0 : i32, i32
  }
  func.func @transform_5(%arg0: i32, %arg1: i32) -> (i32, i32) {
    %c0_i32 = arith.constant 0 : i32
    %c0_i32_0 = arith.constant 0 : i32
    return %arg0, %c0_i32 : i32, i32
  }
}

module attributes {stable_mosaic.version = 11 : i64} {
  func.func @_gcn_layer2_kernel(%arg0: i32, %arg1: i32, %arg2: memref<256x256xbf16, #tpu.memory_space<vmem>>, %arg3: memref<256x1xbf16, #tpu.memory_space<vmem>>, %arg4: memref<1x1xf32, #tpu.memory_space<smem>>, %arg5: memref<256x1xf32, #tpu.memory_space<vmem>>) attributes {dimension_semantics = [#tpu.dimension_semantics<parallel>, #tpu.dimension_semantics<arbitrary>], iteration_bounds = array<i64: 2, 2>, scalar_prefetch = 0 : i64, scratch_operands = 0 : i64, tpu.core_type = #tpu.core_type<tc>, window_params = [{transform_indices = @transform_0, window_bounds = array<i64: 256, 256>}, {transform_indices = @transform_1, window_bounds = array<i64: 256, 1>}, {transform_indices = @transform_2, window_bounds = array<i64: 1, 1>}, {transform_indices = @transform_3, window_bounds = array<i64: 256, 1>}]} {
    %c0_i32 = arith.constant 0 : i32
    %0 = arith.cmpi eq, %arg1, %c0_i32 : i32
    %1 = arith.extui %0 : i1 to i32
    %c0_i32_0 = arith.constant 0 : i32
    %2 = arith.cmpi ne, %1, %c0_i32_0 : i32
    scf.if %2 {
      %cst_9 = arith.constant 0.000000e+00 : f32
      %12 = vector.broadcast %cst_9 : f32 to vector<256x1xf32>
      %c0_10 = arith.constant 0 : index
      %c0_11 = arith.constant 0 : index
      %13 = vector.load %arg5[%c0_10, %c0_11] : memref<256x1xf32, #tpu.memory_space<vmem>>, vector<256x1xf32>
      tpu.vector_store %arg5[%c0_10, %c0_11], %12 {strides = array<i32>} : memref<256x1xf32, #tpu.memory_space<vmem>>, vector<256x1xf32>,
    } else {
    }
    %c0 = arith.constant 0 : index
    %c0_1 = arith.constant 0 : index
    %3 = vector.load %arg5[%c0, %c0_1] : memref<256x1xf32, #tpu.memory_space<vmem>>, vector<256x1xf32>
    %c0_2 = arith.constant 0 : index
    %c0_3 = arith.constant 0 : index
    %4 = vector.load %arg2[%c0_2, %c0_3] : memref<256x256xbf16, #tpu.memory_space<vmem>>, vector<256x256xbf16>
    %c0_4 = arith.constant 0 : index
    %c0_5 = arith.constant 0 : index
    %5 = vector.load %arg3[%c0_4, %c0_5] : memref<256x1xbf16, #tpu.memory_space<vmem>>, vector<256x1xbf16>
    %cst = arith.constant dense<0.000000e+00> : vector<256x1xf32>
    %6 = tpu.matmul %4, %5, %cst {dimension_numbers = #tpu.dot_dimension_numbers<[1], [0], [0], [1], [0, 0, 1, 1], [], []>} : vector<256x256xbf16>, vector<256x1xbf16>, vector<256x1xf32> -> vector<256x1xf32>
    %7 = arith.addf %3, %6 : vector<256x1xf32>
    %c0_6 = arith.constant 0 : index
    %c0_7 = arith.constant 0 : index
    %8 = vector.load %arg5[%c0_6, %c0_7] : memref<256x1xf32, #tpu.memory_space<vmem>>, vector<256x1xf32>
    tpu.vector_store %arg5[%c0_6, %c0_7], %7 {strides = array<i32>} : memref<256x1xf32, #tpu.memory_space<vmem>>, vector<256x1xf32>,
    %c1_i32 = arith.constant 1 : i32
    %9 = arith.cmpi eq, %arg1, %c1_i32 : i32
    %10 = arith.extui %9 : i1 to i32
    %c0_i32_8 = arith.constant 0 : i32
    %11 = arith.cmpi ne, %10, %c0_i32_8 : i32
    scf.if %11 {
      %c0_9 = arith.constant 0 : index
      %c0_10 = arith.constant 0 : index
      %12 = vector.load %arg5[%c0_9, %c0_10] : memref<256x1xf32, #tpu.memory_space<vmem>>, vector<256x1xf32>
      %c0_11 = arith.constant 0 : index
      %c0_12 = arith.constant 0 : index
      %13 = memref.load %arg4[%c0_11, %c0_12] : memref<1x1xf32, #tpu.memory_space<smem>>
      %14 = vector.broadcast %13 : f32 to vector<256x1xf32>
      %15 = arith.addf %12, %14 : vector<256x1xf32>
      %c0_13 = arith.constant 0 : index
      %c0_14 = arith.constant 0 : index
      %16 = vector.load %arg5[%c0_13, %c0_14] : memref<256x1xf32, #tpu.memory_space<vmem>>, vector<256x1xf32>
      tpu.vector_store %arg5[%c0_13, %c0_14], %15 {strides = array<i32>} : memref<256x1xf32, #tpu.memory_space<vmem>>, vector<256x1xf32>,
    } else {
    }
    return
  }
  func.func @transform_0(%arg0: i32, %arg1: i32) -> (i32, i32) {
    %c0_i32 = arith.constant 0 : i32
    return %arg0, %arg1 : i32, i32
  }
  func.func @transform_1(%arg0: i32, %arg1: i32) -> (i32, i32) {
    %c0_i32 = arith.constant 0 : i32
    %c0_i32_0 = arith.constant 0 : i32
    return %arg1, %c0_i32 : i32, i32
  }
  func.func @transform_2(%arg0: i32, %arg1: i32) -> (i32, i32) {
    %c0_i32 = arith.constant 0 : i32
    %c0_i32_0 = arith.constant 0 : i32
    %c0_i32_1 = arith.constant 0 : i32
    return %c0_i32, %c0_i32_0 : i32, i32
  }
  func.func @transform_3(%arg0: i32, %arg1: i32) -> (i32, i32) {
    %c0_i32 = arith.constant 0 : i32
    %c0_i32_0 = arith.constant 0 : i32
    return %arg0, %c0_i32 : i32, i32
  }
}

</mosaic_0001>

<llo_original>
// kernel: gcn_forward.3
$region0: #{gcn_forward.3}
  #allocation0 [shape = 'u32[]', space=smem, size = 0x4, offset = 0x4, fixed_abs, tag = 'smem constant byte address 0x4 - core index']
  #allocation1 [shape = 'u32[144,128]{1,0:T(1,128)}', space=vmem, size = 0x12000, scoped, tag = 'internal scratch']
  #allocation2 [shape = 'f32[1,1]{1,0:T(1,128)S(6)}', space=smem, size = 0x200, scoped, tag = 'scoped memory for gcn_forward.3']
  %s0 = inlined_call_operand.vmem [shape: bf16[512,512], index: 0, kind: input, shape index: {}]
  %s1 = inlined_call_operand.vmem [shape: bf16[512,1], index: 1, kind: input, shape index: {}]
  %s2 = inlined_call_operand.<no memory space> [shape: f32[1,1], index: 2, kind: input, shape index: {}]
  %s3 = inlined_call_operand.vmem [shape: f32[512,1], index: 3, kind: output, shape index: {}]
  %s4 = sld [smem:[#allocation0]]
  $region91: #{gcn_forward.3} parent=0
    _
  %s6 = ssub.s32 1, %s4
  %s7 = scalar_select 0, %s6, %s4
  %8 = sst [smem:[#allocation2]] %s2
  $region1: #{gcn_forward.3} parent=0
    #allocation3 [shape = 'u8[262144]{0}', space=vmem, size = 0x40000, scoped, tag = 'input window, operand 0']
    loop: start=0, step=1, limit=6
    $region2: #{gcn_forward.3} parent=1 // loop_pre_header
      _
    $region3: #{gcn_forward.3} parent=1 // loop_header
      %s10 = sphi 0, %s14
      %p11 = scmp.ge.s32.totalorder %s10, 6
      %s17 = sphi 0, %s29
      %s18 = sphi 0, %s25
      %s19 = sphi 0, %s17
      %s20 = sphi 0, %s18
      %s21 = sphi 0, %s19
      %s22 = sphi 0, %s20
      %s34 = sphi 0, %s36
      %s37 = sphi 0, %s34
      %s38 = sphi 0, %s37
      %s54 = sphi 0, %s38
      %s60 = sphi 0, %s62
      %s63 = sphi 0, %s60
      %s64 = sphi 0, %s63
      %s80 = sphi 0, %s64
      %s84 = sphi 0, %s84
      %s86 = sphi 0, %s84
      %s87 = sphi 0, %s86
      %s101 = sphi 0, %s87
      %s107 = sphi 0, %s109
      %s110 = sphi 0, %s107
      %s111 = sphi 0, %s110
      %s127 = sphi 0, %s111
    $region4: #{gcn_forward.3} parent=1 // loop_header_branch
      %13 = sbr.rel (%p11) target = $region8
    $region5: #{gcn_forward.3} parent=1 // loop_body
      %s15 = ssub.s32 %s10, 1
      %s16 = ssub.s32 %s10, 2
      %s23 = sadd.s32 1, %s18
      %p24 = scmp.ge.s32.totalorder %s23, 2
      %s25 = scalar_select %p24, 0, %s23
      %s26 = sadd.s32 1, %s17
      %s27 = scalar_select %p24, %s26, %s17
      %p28 = scmp.ge.s32.totalorder %s27, 2
      %s29 = scalar_select %p28, 0, %s27
      %s30 = ssub.s32 %s17, %s29
      %s31 = ssub.s32 %s18, %s25
      %s32 = sor.u32 %s30, %s31
      %p33 = scmp.eq.s32.totalorder %s32, 0
      %s35 = sadd.s32 %s34, 1
      %s36 = scalar_select %p33, %s34, %s35
      %p39 = pneg %p33
      %p40 = scmp.eq.s32.totalorder %s10, 3
      %p41 = por %p39, %p40
      %p42 = scmp.ne.s32.totalorder %s34, %s37
      %p43 = scmp.eq.s32.totalorder %s10, 0
      %p44 = por %p42, %p43
      %p45 = scmp.ne.s32.totalorder %s34, %s37
      %p46 = scmp.eq.s32.totalorder %s15, 3
      %p47 = por %p45, %p46
      %p48 = scmp.ne.s32.totalorder %s37, %s38
      %p49 = scmp.eq.s32.totalorder %s15, 0
      %p50 = por %p48, %p49
      %p51 = scmp.ne.s32.totalorder %s37, %s38
      %p52 = scmp.eq.s32.totalorder %s16, 3
      %p53 = por %p51, %p52
      %p55 = scmp.ne.s32.totalorder %s38, %s54
      %p56 = scmp.eq.s32.totalorder %s16, 0
      %p57 = por %p55, %p56
      %s58 = ssub.s32 %s18, %s25
      %p59 = scmp.eq.s32.totalorder %s58, 0
      %s61 = sadd.s32 %s60, 1
      %s62 = scalar_select %p59, %s60, %s61
      %p65 = pneg %p59
      %p66 = scmp.eq.s32.totalorder %s10, 3
      %p67 = por %p65, %p66
      %p68 = scmp.ne.s32.totalorder %s60, %s63
      %p69 = scmp.eq.s32.totalorder %s10, 0
      %p70 = por %p68, %p69
      %p71 = scmp.ne.s32.totalorder %s60, %s63
      %p72 = scmp.eq.s32.totalorder %s15, 3
      %p73 = por %p71, %p72
      %p74 = scmp.ne.s32.totalorder %s63, %s64
      %p75 = scmp.eq.s32.totalorder %s15, 0
      %p76 = por %p74, %p75
      %p77 = scmp.ne.s32.totalorder %s63, %s64
      %p78 = scmp.eq.s32.totalorder %s16, 3
      %p79 = por %p77, %p78
      %p81 = scmp.ne.s32.totalorder %s64, %s80
      %p82 = scmp.eq.s32.totalorder %s16, 0
      %p83 = por %p81, %p82
      %s85 = sadd.s32 %s84, 1
      %p88 = scmp.eq.s32.totalorder %s10, 3
      %p89 = scmp.ne.s32.totalorder %s84, %s86
      %p90 = scmp.eq.s32.totalorder %s10, 0
      %p91 = por %p89, %p90
      %p92 = scmp.ne.s32.totalorder %s84, %s86
      %p93 = scmp.eq.s32.totalorder %s15, 3
      %p94 = por %p92, %p93
      %p95 = scmp.ne.s32.totalorder %s86, %s87
      %p96 = scmp.eq.s32.totalorder %s15, 0
      %p97 = por %p95, %p96
      %p98 = scmp.ne.s32.totalorder %s86, %s87
      %p99 = scmp.eq.s32.totalorder %s16, 3
      %p100 = por %p98, %p99
      %p102 = scmp.ne.s32.totalorder %s87, %s101
      %p103 = scmp.eq.s32.totalorder %s16, 0
      %p104 = por %p102, %p103
      %s105 = ssub.s32 %s17, %s29
      %p106 = scmp.eq.s32.totalorder %s105, 0
      %s108 = sadd.s32 %s107, 1
      %s109 = scalar_select %p106, %s107, %s108
      %p112 = pneg %p106
      %p113 = scmp.eq.s32.totalorder %s10, 3
      %p114 = por %p112, %p113
      %p115 = scmp.ne.s32.totalorder %s107, %s110
      %p116 = scmp.eq.s32.totalorder %s10, 0
      %p117 = por %p115, %p116
      %p118 = scmp.ne.s32.totalorder %s107, %s110
      %p119 = scmp.eq.s32.totalorder %s15, 3
      %p120 = por %p118, %p119
      %p121 = scmp.ne.s32.totalorder %s110, %s111
      %p122 = scmp.eq.s32.totalorder %s15, 0
      %p123 = por %p121, %p122
      %p124 = scmp.ne.s32.totalorder %s110, %s111
      %p125 = scmp.eq.s32.totalorder %s16, 3
      %p126 = por %p124, %p125
      %p128 = scmp.ne.s32.totalorder %s111, %s127
      %p129 = scmp.eq.s32.totalorder %s16, 0
      %p130 = por %p128, %p129
      %p131 = scmp.le.s32.totalorder 1, %s10
      %p132 = scmp.lt.s32.totalorder %s10, 5
      %p133 = pnand %p131, %p132
      %p134 = pneg %p133
      // Predicated region
      $region9: #{gcn_forward.3} parent=5 // pred_check
        _
      $region10: #{gcn_forward.3} parent=5 // pred_check_branch
        %136 = sbr.rel (%p133) target = $region12
      $region11: #{gcn_forward.3} parent=5 // pred_region
        %s137 = ssub.s32 %s10, 1
        // Predicated region
        $region13: #{gcn_forward.3} parent=11 // pred_check
          %p138 = pneg %p97
        $region14: #{gcn_forward.3} parent=11 // pred_check_branch
          %140 = sbr.rel (%p138) target = $region16
        $region15: #{gcn_forward.3} parent=11 // pred_region
          _
        $region16: #{gcn_forward.3} parent=11 // pred_fallthru
          _
      $region12: #{gcn_forward.3} parent=5 // pred_fallthru
        _
      %p141 = scmp.lt.s32.totalorder %s10, 4
      // Predicated region
      $region17: #{gcn_forward.3} parent=5 // pred_check
        %p142 = pneg %p141
      $region18: #{gcn_forward.3} parent=5 // pred_check_branch
        %144 = sbr.rel (%p142) target = $region20
      $region19: #{gcn_forward.3} parent=5 // pred_region
        // Predicated region
        $region21: #{gcn_forward.3} parent=19 // pred_check
          %p145 = pneg %p44
        $region22: #{gcn_forward.3} parent=19 // pred_check_branch
          %147 = sbr.rel (%p145) target = $region24
        $region23: #{gcn_forward.3} parent=19 // pred_region
          %s148 = sand.u32 %s34, 1
          %s149 = sand.u32 %s34, 1
          %s150 = smul.addr %s149, 256
          %s151 = scalar_lea.vmem [#allocation3], %s150
          %s152 = smul.u32 32, %s17
          %s153 = smul.u32 2, %s18
          %s154 = smul.addr %s152, 4
          %s155 = sadd.s32 %s153, %s154
          %s156 = smul.addr %s155, 4
          %s157 = scalar_lea.vmem %s0, %s156
          // Predicated region
          $region25: #{gcn_forward.3} parent=23 // pred_check
            _
          $region26: #{gcn_forward.3} parent=23 // pred_check_branch
            %159 = sbr.rel (0) target = $region28
          $region27: #{gcn_forward.3} parent=23 // pred_region
            // Predicated region
            $region29: #{gcn_forward.3} parent=27 // pred_check
              _
            $region30: #{gcn_forward.3} parent=27 // pred_check_branch
              %161 = sbr.rel (0) target = $region32
            $region31: #{gcn_forward.3} parent=27 // pred_region
              // Predicated region
              $region44: #{gcn_forward.3} parent=31 // pred_check
                _
              $region45: #{gcn_forward.3} parent=31 // pred_check_branch
                %238 = sbr.rel (0) target = $region47
              $region46: #{gcn_forward.3} parent=31 // pred_region
                loop: start=0, step=1, limit=1
                $region48: #{gcn_forward.3} parent=46 // loop_pre_header
                  _
                $region49: #{gcn_forward.3} parent=46 // loop_header
                  %s240 = sphi 0, %s244
                  %p241 = scmp.ge.s32.totalorder %s240, 1
                  %s245 = sphi %s157, %s157
                  %s246 = sphi %s151, %s151
                $region50: #{gcn_forward.3} parent=46 // loop_header_branch
                  %243 = sbr.rel (%p241) target = $region54
                $region51: #{gcn_forward.3} parent=46 // loop_body
                  %v247 = vld [vmem:[%s245] sm:$0xff]
                  %248 = vst [vmem:[%s246] sm:$0xff] %v247
                  %v249 = vld [vmem:[%s245 + $0x10] sm:$0xff]
                  %250 = vst [vmem:[%s246 + $0x8] sm:$0xff] %v249
                  %v251 = vld [vmem:[%s245 + $0x20] sm:$0xff]
                  %252 = vst [vmem:[%s246 + $0x10] sm:$0xff] %v251
                  %v253 = vld [vmem:[%s245 + $0x30] sm:$0xff]
                  %254 = vst [vmem:[%s246 + $0x18] sm:$0xff] %v253
                  %v255 = vld [vmem:[%s245 + $0x40] sm:$0xff]
                  %256 = vst [vmem:[%s246 + $0x20] sm:$0xff] %v255
                  %v257 = vld [vmem:[%s245 + $0x50] sm:$0xff]
                  %258 = vst [vmem:[%s246 + $0x28] sm:$0xff] %v257
                  %v259 = vld [vmem:[%s245 + $0x60] sm:$0xff]
                  %260 = vst [vmem:[%s246 + $0x30] sm:$0xff] %v259
                  %v261 = vld [vmem:[%s245 + $0x70] sm:$0xff]
                  %262 = vst [vmem:[%s246 + $0x38] sm:$0xff] %v261
                  %v263 = vld [vmem:[%s245 + $0x80] sm:$0xff]
                  %264 = vst [vmem:[%s246 + $0x40] sm:$0xff] %v263
                  %v265 = vld [vmem:[%s245 + $0x90] sm:$0xff]
                  %266 = vst [vmem:[%s246 + $0x48] sm:$0xff] %v265
                  %v267 = vld [vmem:[%s245 + $0xa0] sm:$0xff]
                  %268 = vst [vmem:[%s246 + $0x50] sm:$0xff] %v267
                  %v269 = vld [vmem:[%s245 + $0xb0] sm:$0xff]
                  %270 = vst [vmem:[%s246 + $0x58] sm:$0xff] %v269
                  %v271 = vld [vmem:[%s245 + $0xc0] sm:$0xff]
                  %272 = vst [vmem:[%s246 + $0x60] sm:$0xff] %v271
                  %v273 = vld [vmem:[%s245 + $0xd0] sm:$0xff]
                  %274 = vst [vmem:[%s246 + $0x68] sm:$0xff] %v273
                  %v275 = vld [vmem:[%s245 + $0xe0] sm:$0xff]
                  %276 = vst [vmem:[%s246 + $0x70] sm:$0xff] %v275
                  %v277 = vld [vmem:[%s245 + $0xf0] sm:$0xff]
                  %278 = vst [vmem:[%s246 + $0x78] sm:$0xff] %v277
                  %v279 = vld [vmem:[%s245 + $0x100] sm:$0xff]
                  %280 = vst [vmem:[%s246 + $0x80] sm:$0xff] %v279
                  %v281 = vld [vmem:[%s245 + $0x110] sm:$0xff]
                  %282 = vst [vmem:[%s246 + $0x88] sm:$0xff] %v281
                  %v283 = vld [vmem:[%s245 + $0x120] sm:$0xff]
                  %284 = vst [vmem:[%s246 + $0x90] sm:$0xff] %v283
                  %v285 = vld [vmem:[%s245 + $0x130] sm:$0xff]
                  %286 = vst [vmem:[%s246 + $0x98] sm:$0xff] %v285
                  %v287 = vld [vmem:[%s245 + $0x140] sm:$0xff]
                  %288 = vst [vmem:[%s246 + $0xa0] sm:$0xff] %v287
                  %v289 = vld [vmem:[%s245 + $0x150] sm:$0xff]
                  %290 = vst [vmem:[%s246 + $0xa8] sm:$0xff] %v289
                  %v291 = vld [vmem:[%s245 + $0x160] sm:$0xff]
                  %292 = vst [vmem:[%s246 + $0xb0] sm:$0xff] %v291
                  %v293 = vld [vmem:[%s245 + $0x170] sm:$0xff]
                  %294 = vst [vmem:[%s246 + $0xb8] sm:$0xff] %v293
                  %v295 = vld [vmem:[%s245 + $0x180] sm:$0xff]
                  %296 = vst [vmem:[%s246 + $0xc0] sm:$0xff] %v295
                  %v297 = vld [vmem:[%s245 + $0x190] sm:$0xff]
                  %298 = vst [vmem:[%s246 + $0xc8] sm:$0xff] %v297
                  %v299 = vld [vmem:[%s245 + $0x1a0] sm:$0xff]
                  %300 = vst [vmem:[%s246 + $0xd0] sm:$0xff] %v299
                  %v301 = vld [vmem:[%s245 + $0x1b0] sm:$0xff]
                  %302 = vst [vmem:[%s246 + $0xd8] sm:$0xff] %v301
                  %v303 = vld [vmem:[%s245 + $0x1c0] sm:$0xff]
                  %304 = vst [vmem:[%s246 + $0xe0] sm:$0xff] %v303
                  %v305 = vld [vmem:[%s245 + $0x1d0] sm:$0xff]
                  %306 = vst [vmem:[%s246 + $0xe8] sm:$0xff] %v305
                  %v307 = vld [vmem:[%s245 + $0x1e0] sm:$0xff]
                  %308 = vst [vmem:[%s246 + $0xf0] sm:$0xff] %v307
                  %v309 = vld [vmem:[%s245 + $0x1f0] sm:$0xff]
                  %310 = vst [vmem:[%s246 + $0xf8] sm:$0xff] %v309
                $region52: #{gcn_forward.3} parent=46 // loop_footer
                  %s244 = sadd.s32 1, %s240
                $region53: #{gcn_forward.3} parent=46 // loop_footer_branch
                  %239 = sbr.rel target = $region49
                $region54: #{gcn_forward.3} parent=46 // loop_exit
                  _
              $region47: #{gcn_forward.3} parent=31 // pred_fallthru
                _
              // Predicated region
              $region55: #{gcn_forward.3} parent=31 // pred_check
                _
              $region56: #{gcn_forward.3} parent=31 // pred_check_branch
                %312 = sbr.rel target = $region58
              $region57: #{gcn_forward.3} parent=31 // pred_region
                _
              $region58: #{gcn_forward.3} parent=31 // pred_fallthru
                _
            $region32: #{gcn_forward.3} parent=27 // pred_fallthru
              _
            // Predicated region
            $region33: #{gcn_forward.3} parent=27 // pred_check
              _
            $region34: #{gcn_forward.3} parent=27 // pred_check_branch
              %163 = sbr.rel target = $region36
            $region35: #{gcn_forward.3} parent=27 // pred_region
              loop: start=0, step=1, limit=1
              $region37: #{gcn_forward.3} parent=35 // loop_pre_header
                _
              $region38: #{gcn_forward.3} parent=35 // loop_header
                %s166 = sphi 0, %s170
                %p167 = scmp.ge.s32.totalorder %s166, 1
                %s171 = sphi %s157, %s157
                %s172 = sphi %s151, %s151
              $region39: #{gcn_forward.3} parent=35 // loop_header_branch
                %169 = sbr.rel (%p167) target = $region43
              $region40: #{gcn_forward.3} parent=35 // loop_body
                %v173 = vld [vmem:[%s171] sm:$0xff]
                %174 = vst [vmem:[%s172] sm:$0xff] %v173
                %v175 = vld [vmem:[%s171 + $0x10] sm:$0xff]
                %176 = vst [vmem:[%s172 + $0x8] sm:$0xff] %v175
                %v177 = vld [vmem:[%s171 + $0x20] sm:$0xff]
                %178 = vst [vmem:[%s172 + $0x10] sm:$0xff] %v177
                %v179 = vld [vmem:[%s171 + $0x30] sm:$0xff]
                %180 = vst [vmem:[%s172 + $0x18] sm:$0xff] %v179
                %v181 = vld [vmem:[%s171 + $0x40] sm:$0xff]
                %182 = vst [vmem:[%s172 + $0x20] sm:$0xff] %v181
                %v183 = vld [vmem:[%s171 + $0x50] sm:$0xff]
                %184 = vst [vmem:[%s172 + $0x28] sm:$0xff] %v183
                %v185 = vld [vmem:[%s171 + $0x60] sm:$0xff]
                %186 = vst [vmem:[%s172 + $0x30] sm:$0xff] %v185
                %v187 = vld [vmem:[%s171 + $0x70] sm:$0xff]
                %188 = vst [vmem:[%s172 + $0x38] sm:$0xff] %v187
                %v189 = vld [vmem:[%s171 + $0x80] sm:$0xff]
                %190 = vst [vmem:[%s172 + $0x40] sm:$0xff] %v189
                %v191 = vld [vmem:[%s171 + $0x90] sm:$0xff]
                %192 = vst [vmem:[%s172 + $0x48] sm:$0xff] %v191
                %v193 = vld [vmem:[%s171 + $0xa0] sm:$0xff]
                %194 = vst [vmem:[%s172 + $0x50] sm:$0xff] %v193
                %v195 = vld [vmem:[%s171 + $0xb0] sm:$0xff]
                %196 = vst [vmem:[%s172 + $0x58] sm:$0xff] %v195
                %v197 = vld [vmem:[%s171 + $0xc0] sm:$0xff]
                %198 = vst [vmem:[%s172 + $0x60] sm:$0xff] %v197
                %v199 = vld [vmem:[%s171 + $0xd0] sm:$0xff]
                %200 = vst [vmem:[%s172 + $0x68] sm:$0xff] %v199
                %v201 = vld [vmem:[%s171 + $0xe0] sm:$0xff]
                %202 = vst [vmem:[%s172 + $0x70] sm:$0xff] %v201
                %v203 = vld [vmem:[%s171 + $0xf0] sm:$0xff]
                %204 = vst [vmem:[%s172 + $0x78] sm:$0xff] %v203
                %v205 = vld [vmem:[%s171 + $0x100] sm:$0xff]
                %206 = vst [vmem:[%s172 + $0x80] sm:$0xff] %v205
                %v207 = vld [vmem:[%s171 + $0x110] sm:$0xff]
                %208 = vst [vmem:[%s172 + $0x88] sm:$0xff] %v207
                %v209 = vld [vmem:[%s171 + $0x120] sm:$0xff]
                %210 = vst [vmem:[%s172 + $0x90] sm:$0xff] %v209
                %v211 = vld [vmem:[%s171 + $0x130] sm:$0xff]
                %212 = vst [vmem:[%s172 + $0x98] sm:$0xff] %v211
                %v213 = vld [vmem:[%s171 + $0x140] sm:$0xff]
                %214 = vst [vmem:[%s172 + $0xa0] sm:$0xff] %v213
                %v215 = vld [vmem:[%s171 + $0x150] sm:$0xff]
                %216 = vst [vmem:[%s172 + $0xa8] sm:$0xff] %v215
                %v217 = vld [vmem:[%s171 + $0x160] sm:$0xff]
                %218 = vst [vmem:[%s172 + $0xb0] sm:$0xff] %v217
                %v219 = vld [vmem:[%s171 + $0x170] sm:$0xff]
                %220 = vst [vmem:[%s172 + $0xb8] sm:$0xff] %v219
                %v221 = vld [vmem:[%s171 + $0x180] sm:$0xff]
                %222 = vst [vmem:[%s172 + $0xc0] sm:$0xff] %v221
                %v223 = vld [vmem:[%s171 + $0x190] sm:$0xff]
                %224 = vst [vmem:[%s172 + $0xc8] sm:$0xff] %v223
                %v225 = vld [vmem:[%s171 + $0x1a0] sm:$0xff]
                %226 = vst [vmem:[%s172 + $0xd0] sm:$0xff] %v225
                %v227 = vld [vmem:[%s171 + $0x1b0] sm:$0xff]
                %228 = vst [vmem:[%s172 + $0xd8] sm:$0xff] %v227
                %v229 = vld [vmem:[%s171 + $0x1c0] sm:$0xff]
                %230 = vst [vmem:[%s172 + $0xe0] sm:$0xff] %v229
                %v231 = vld [vmem:[%s171 + $0x1d0] sm:$0xff]
                %232 = vst [vmem:[%s172 + $0xe8] sm:$0xff] %v231
                %v233 = vld [vmem:[%s171 + $0x1e0] sm:$0xff]
                %234 = vst [vmem:[%s172 + $0xf0] sm:$0xff] %v233
                %v235 = vld [vmem:[%s171 + $0x1f0] sm:$0xff]
                %236 = vst [vmem:[%s172 + $0xf8] sm:$0xff] %v235
              $region41: #{gcn_forward.3} parent=35 // loop_footer
                %s170 = sadd.s32 1, %s166
              $region42: #{gcn_forward.3} parent=35 // loop_footer_branch
                %165 = sbr.rel target = $region38
              $region43: #{gcn_forward.3} parent=35 // loop_exit
                _
            $region36: #{gcn_forward.3} parent=27 // pred_fallthru
              _
          $region28: #{gcn_forward.3} parent=23 // pred_fallthru
            _
          %313 = vnop
        $region24: #{gcn_forward.3} parent=19 // pred_fallthru
          _
        // Predicated region
        $region59: #{gcn_forward.3} parent=19 // pred_check
          %p314 = pneg %p70
        $region60: #{gcn_forward.3} parent=19 // pred_check_branch
          %316 = sbr.rel (%p314) target = $region62
        $region61: #{gcn_forward.3} parent=19 // pred_region
          %s317 = smul.u32 32, %s18
          %p318 = scmp.lt.s32.totalorder %s317, 63
          %s319 = scalar_select %p318, %s317, 63
          %s320 = smul.addr %s319, 4
          %s321 = scalar_lea.vmem %s1, %s320
          %s322 = smul.u32 32, %s18
        $region62: #{gcn_forward.3} parent=19 // pred_fallthru
          _
      $region20: #{gcn_forward.3} parent=5 // pred_fallthru
        _
      %p323 = scmp.le.s32.totalorder 1, %s10
      %p324 = scmp.lt.s32.totalorder %s10, 5
      %p325 = pnand %p323, %p324
      %p326 = pneg %p325
      // Predicated region
      $region63: #{gcn_forward.3} parent=5 // pred_check
        _
      $region64: #{gcn_forward.3} parent=5 // pred_check_branch
        %328 = sbr.rel (%p325) target = $region66
      $region65: #{gcn_forward.3} parent=5 // pred_region
        %s329 = ssub.s32 %s10, 1
        %s330 = sand.u32 %s37, 1
        %s331 = sand.u32 %s37, 1
        %s332 = smul.addr %s331, 256
        %s333 = scalar_lea.vmem [#allocation3], %s332
        // Predicated region
        $region67: #{gcn_forward.3} parent=65 // pred_check
          %p334 = pneg %p50
        $region68: #{gcn_forward.3} parent=65 // pred_check_branch
          %336 = sbr.rel (%p334) target = $region70
        $region69: #{gcn_forward.3} parent=65 // pred_region
          _
        $region70: #{gcn_forward.3} parent=65 // pred_fallthru
          _
        %s337 = sand.u32 %s37, 1
        %s338 = sand.u32 %s37, 1
        %s339 = smul.addr %s338, 256
        %s340 = scalar_lea.vmem [#allocation3], %s339
        %p341 = pneg %p50
        %p342 = pneg %p47
        %s343 = smul.u32 32, %s20
        %p344 = scmp.lt.s32.totalorder %s343, 63
        %s345 = scalar_select %p344, %s343, 63
        %s346 = smul.addr %s345, 4
        %s347 = scalar_lea.vmem %s1, %s346
        %p348 = pneg %p76
        %p349 = pneg %p73
        %p350 = pneg %p97
        %p351 = pneg %p94
        %p352 = pneg %p123
        %p353 = pneg %p120
        %s354 = smul.u32 32, %s19
        %p355 = scmp.lt.s32.totalorder %s354, 63
        %s356 = scalar_select %p355, %s354, 63
        %s357 = smul.addr %s356, 8
        %s358 = scalar_lea.vmem %s3, %s357
        %s359 = smul.u32 32, %s19
        %s360 = smul.u32 2, %s20
        %s361 = smul.u32 32, %s20
        %p362 = scmp.lt.s32.totalorder %s361, 63
        %s363 = scalar_select %p362, %s361, 63
        %s364 = smul.addr %s363, 4
        %s365 = scalar_lea.vmem %s1, %s364
        %s366 = smul.u32 32, %s20
        %s367 = smul.u32 32, %s19
        %p368 = scmp.lt.s32.totalorder %s367, 63
        %s369 = scalar_select %p368, %s367, 63
        %s370 = smul.addr %s369, 8
        %s371 = scalar_lea.vmem %s3, %s370
        %s372 = smul.u32 32, %s19
        %p374 = scmp.eq.s32.totalorder %s20, 0
        // Predicated region
        $region71: #{gcn_forward.3} parent=65 // pred_check
          %p375 = pneg %p374
        $region72: #{gcn_forward.3} parent=65 // pred_check_branch
          %377 = sbr.rel (%p375) target = $region74
        $region73: #{gcn_forward.3} parent=65 // pred_region
          %vm378 = vcmask 7168
          %379 = vst.msk [vmem:[%s371] sm:$0xff] %vm378, 0.0
          %380 = vst.msk [vmem:[%s371 + $0x8] sm:$0xff] %vm378, 0.0
          %381 = vst.msk [vmem:[%s371 + $0x10] sm:$0xff] %vm378, 0.0
          %382 = vst.msk [vmem:[%s371 + $0x18] sm:$0xff] %vm378, 0.0
          %383 = vst.msk [vmem:[%s371 + $0x20] sm:$0xff] %vm378, 0.0
          %384 = vst.msk [vmem:[%s371 + $0x28] sm:$0xff] %vm378, 0.0
          %385 = vst.msk [vmem:[%s371 + $0x30] sm:$0xff] %vm378, 0.0
          %386 = vst.msk [vmem:[%s371 + $0x38] sm:$0xff] %vm378, 0.0
          %387 = vst.msk [vmem:[%s371 + $0x40] sm:$0xff] %vm378, 0.0
          %388 = vst.msk [vmem:[%s371 + $0x48] sm:$0xff] %vm378, 0.0
          %389 = vst.msk [vmem:[%s371 + $0x50] sm:$0xff] %vm378, 0.0
          %390 = vst.msk [vmem:[%s371 + $0x58] sm:$0xff] %vm378, 0.0
          %391 = vst.msk [vmem:[%s371 + $0x60] sm:$0xff] %vm378, 0.0
          %392 = vst.msk [vmem:[%s371 + $0x68] sm:$0xff] %vm378, 0.0
          %393 = vst.msk [vmem:[%s371 + $0x70] sm:$0xff] %vm378, 0.0
          %394 = vst.msk [vmem:[%s371 + $0x78] sm:$0xff] %vm378, 0.0
          %395 = vst.msk [vmem:[%s371 + $0x80] sm:$0xff] %vm378, 0.0
          %396 = vst.msk [vmem:[%s371 + $0x88] sm:$0xff] %vm378, 0.0
          %397 = vst.msk [vmem:[%s371 + $0x90] sm:$0xff] %vm378, 0.0
          %398 = vst.msk [vmem:[%s371 + $0x98] sm:$0xff] %vm378, 0.0
          %399 = vst.msk [vmem:[%s371 + $0xa0] sm:$0xff] %vm378, 0.0
          %400 = vst.msk [vmem:[%s371 + $0xa8] sm:$0xff] %vm378, 0.0
          %401 = vst.msk [vmem:[%s371 + $0xb0] sm:$0xff] %vm378, 0.0
          %402 = vst.msk [vmem:[%s371 + $0xb8] sm:$0xff] %vm378, 0.0
          %403 = vst.msk [vmem:[%s371 + $0xc0] sm:$0xff] %vm378, 0.0
          %404 = vst.msk [vmem:[%s371 + $0xc8] sm:$0xff] %vm378, 0.0
          %405 = vst.msk [vmem:[%s371 + $0xd0] sm:$0xff] %vm378, 0.0
          %406 = vst.msk [vmem:[%s371 + $0xd8] sm:$0xff] %vm378, 0.0
          %407 = vst.msk [vmem:[%s371 + $0xe0] sm:$0xff] %vm378, 0.0
          %408 = vst.msk [vmem:[%s371 + $0xe8] sm:$0xff] %vm378, 0.0
          %409 = vst.msk [vmem:[%s371 + $0xf0] sm:$0xff] %vm378, 0.0
          %410 = vst.msk [vmem:[%s371 + $0xf8] sm:$0xff] %vm378, 0.0
        $region74: #{gcn_forward.3} parent=65 // pred_fallthru
          _
        %v411 = vld [vmem:[%s371] sm:$0xff]
        %v412 = vld [vmem:[%s371 + $0x8] sm:$0xff]
        %v413 = vld [vmem:[%s371 + $0x10] sm:$0xff]
        %v414 = vld [vmem:[%s371 + $0x18] sm:$0xff]
        %v415 = vld [vmem:[%s371 + $0x20] sm:$0xff]
        %v416 = vld [vmem:[%s371 + $0x28] sm:$0xff]
        %v417 = vld [vmem:[%s371 + $0x30] sm:$0xff]
        %v418 = vld [vmem:[%s371 + $0x38] sm:$0xff]
        %v419 = vld [vmem:[%s371 + $0x40] sm:$0xff]
        %v420 = vld [vmem:[%s371 + $0x48] sm:$0xff]
        %v421 = vld [vmem:[%s371 + $0x50] sm:$0xff]
        %v422 = vld [vmem:[%s371 + $0x58] sm:$0xff]
        %v423 = vld [vmem:[%s371 + $0x60] sm:$0xff]
        %v424 = vld [vmem:[%s371 + $0x68] sm:$0xff]
        %v425 = vld [vmem:[%s371 + $0x70] sm:$0xff]
        %v426 = vld [vmem:[%s371 + $0x78] sm:$0xff]
        %v427 = vld [vmem:[%s371 + $0x80] sm:$0xff]
        %v428 = vld [vmem:[%s371 + $0x88] sm:$0xff]
        %v429 = vld [vmem:[%s371 + $0x90] sm:$0xff]
        %v430 = vld [vmem:[%s371 + $0x98] sm:$0xff]
        %v431 = vld [vmem:[%s371 + $0xa0] sm:$0xff]
        %v432 = vld [vmem:[%s371 + $0xa8] sm:$0xff]
        %v433 = vld [vmem:[%s371 + $0xb0] sm:$0xff]
        %v434 = vld [vmem:[%s371 + $0xb8] sm:$0xff]
        %v435 = vld [vmem:[%s371 + $0xc0] sm:$0xff]
        %v436 = vld [vmem:[%s371 + $0xc8] sm:$0xff]
        %v437 = vld [vmem:[%s371 + $0xd0] sm:$0xff]
        %v438 = vld [vmem:[%s371 + $0xd8] sm:$0xff]
        %v439 = vld [vmem:[%s371 + $0xe0] sm:$0xff]
        %v440 = vld [vmem:[%s371 + $0xe8] sm:$0xff]
        %v441 = vld [vmem:[%s371 + $0xf0] sm:$0xff]
        %v442 = vld [vmem:[%s371 + $0xf8] sm:$0xff]
        %v443 = vld [vmem:[%s333] sm:$0xff]
        %v444 = vld [vmem:[%s333 + $0x8] sm:$0xff]
        %v445 = vld [vmem:[%s333 + $0x10] sm:$0xff]
        %v446 = vld [vmem:[%s333 + $0x18] sm:$0xff]
        %v447 = vld [vmem:[%s333 + $0x20] sm:$0xff]
        %v448 = vld [vmem:[%s333 + $0x28] sm:$0xff]
        %v449 = vld [vmem:[%s333 + $0x30] sm:$0xff]
        %v450 = vld [vmem:[%s333 + $0x38] sm:$0xff]
        %v451 = vld [vmem:[%s333 + $0x40] sm:$0xff]
        %v452 = vld [vmem:[%s333 + $0x48] sm:$0xff]
        %v453 = vld [vmem:[%s333 + $0x50] sm:$0xff]
        %v454 = vld [vmem:[%s333 + $0x58] sm:$0xff]
        %v455 = vld [vmem:[%s333 + $0x60] sm:$0xff]
        %v456 = vld [vmem:[%s333 + $0x68] sm:$0xff]
        %v457 = vld [vmem:[%s333 + $0x70] sm:$0xff]
        %v458 = vld [vmem:[%s333 + $0x78] sm:$0xff]
        %v459 = vld [vmem:[%s333 + $0x80] sm:$0xff]
        %v460 = vld [vmem:[%s333 + $0x88] sm:$0xff]
        %v461 = vld [vmem:[%s333 + $0x90] sm:$0xff]
        %v462 = vld [vmem:[%s333 + $0x98] sm:$0xff]
        %v463 = vld [vmem:[%s333 + $0xa0] sm:$0xff]
        %v464 = vld [vmem:[%s333 + $0xa8] sm:$0xff]
        %v465 = vld [vmem:[%s333 + $0xb0] sm:$0xff]
        %v466 = vld [vmem:[%s333 + $0xb8] sm:$0xff]
        %v467 = vld [vmem:[%s333 + $0xc0] sm:$0xff]
        %v468 = vld [vmem:[%s333 + $0xc8] sm:$0xff]
        %v469 = vld [vmem:[%s333 + $0xd0] sm:$0xff]
        %v470 = vld [vmem:[%s333 + $0xd8] sm:$0xff]
        %v471 = vld [vmem:[%s333 + $0xe0] sm:$0xff]
        %v472 = vld [vmem:[%s333 + $0xe8] sm:$0xff]
        %v473 = vld [vmem:[%s333 + $0xf0] sm:$0xff]
        %v474 = vld [vmem:[%s333 + $0xf8] sm:$0xff]
        %v475 = vld [vmem:[%s365] sm:$0xf]
        %v476 = vld [vmem:[%s365 + $0x4] sm:$0xf]
        %v477 = vld [vmem:[%s365 + $0x8] sm:$0xf]
        %v478 = vld [vmem:[%s365 + $0xc] sm:$0xf]
        %v479 = vld [vmem:[%s365 + $0x10] sm:$0xf]
        %v480 = vld [vmem:[%s365 + $0x14] sm:$0xf]
        %v481 = vld [vmem:[%s365 + $0x18] sm:$0xf]
        %v482 = vld [vmem:[%s365 + $0x1c] sm:$0xf]
        %v483 = vld [vmem:[%s365 + $0x20] sm:$0xf]
        %v484 = vld [vmem:[%s365 + $0x24] sm:$0xf]
        %v485 = vld [vmem:[%s365 + $0x28] sm:$0xf]
        %v486 = vld [vmem:[%s365 + $0x2c] sm:$0xf]
        %v487 = vld [vmem:[%s365 + $0x30] sm:$0xf]
        %v488 = vld [vmem:[%s365 + $0x34] sm:$0xf]
        %v489 = vld [vmem:[%s365 + $0x38] sm:$0xf]
        %v490 = vld [vmem:[%s365 + $0x3c] sm:$0xf]
        %v491 = vld [vmem:[%s365 + $0x40] sm:$0xf]
        %v492 = vld [vmem:[%s365 + $0x44] sm:$0xf]
        %v493 = vld [vmem:[%s365 + $0x48] sm:$0xf]
        %v494 = vld [vmem:[%s365 + $0x4c] sm:$0xf]
        %v495 = vld [vmem:[%s365 + $0x50] sm:$0xf]
        %v496 = vld [vmem:[%s365 + $0x54] sm:$0xf]
        %v497 = vld [vmem:[%s365 + $0x58] sm:$0xf]
        %v498 = vld [vmem:[%s365 + $0x5c] sm:$0xf]
        %v499 = vld [vmem:[%s365 + $0x60] sm:$0xf]
        %v500 = vld [vmem:[%s365 + $0x64] sm:$0xf]
        %v501 = vld [vmem:[%s365 + $0x68] sm:$0xf]
        %v502 = vld [vmem:[%s365 + $0x6c] sm:$0xf]
        %v503 = vld [vmem:[%s365 + $0x70] sm:$0xf]
        %v504 = vld [vmem:[%s365 + $0x74] sm:$0xf]
        %v505 = vld [vmem:[%s365 + $0x78] sm:$0xf]
        %v506 = vld [vmem:[%s365 + $0x7c] sm:$0xf]
        %v539 = vunpack.c.l.b16 %v443
        %v540 = vunpack.c.h.b16 %v443
        %v541 = vunpack.c.l.b16 %v444
        %v542 = vunpack.c.h.b16 %v444
        %v543 = vunpack.c.l.b16 %v445
        %v544 = vunpack.c.h.b16 %v445
        %v545 = vunpack.c.l.b16 %v446
        %v546 = vunpack.c.h.b16 %v446
        %v547 = vunpack.c.l.b16 %v447
        %v548 = vunpack.c.h.b16 %v447
        %v549 = vunpack.c.l.b16 %v448
        %v550 = vunpack.c.h.b16 %v448
        %v551 = vunpack.c.l.b16 %v449
        %v552 = vunpack.c.h.b16 %v449
        %v553 = vunpack.c.l.b16 %v450
        %v554 = vunpack.c.h.b16 %v450
        %v555 = vunpack.c.l.b16 %v451
        %v556 = vunpack.c.h.b16 %v451
        %v557 = vunpack.c.l.b16 %v452
        %v558 = vunpack.c.h.b16 %v452
        %v559 = vunpack.c.l.b16 %v453
        %v560 = vunpack.c.h.b16 %v453
        %v561 = vunpack.c.l.b16 %v454
        %v562 = vunpack.c.h.b16 %v454
        %v563 = vunpack.c.l.b16 %v455
        %v564 = vunpack.c.h.b16 %v455
        %v565 = vunpack.c.l.b16 %v456
        %v566 = vunpack.c.h.b16 %v456
        %v567 = vunpack.c.l.b16 %v457
        %v568 = vunpack.c.h.b16 %v457
        %v569 = vunpack.c.l.b16 %v458
        %v570 = vunpack.c.h.b16 %v458
        %v571 = vunpack.c.l.b16 %v459
        %v572 = vunpack.c.h.b16 %v459
        %v573 = vunpack.c.l.b16 %v460
        %v574 = vunpack.c.h.b16 %v460
        %v575 = vunpack.c.l.b16 %v461
        %v576 = vunpack.c.h.b16 %v461
        %v577 = vunpack.c.l.b16 %v462
        %v578 = vunpack.c.h.b16 %v462
        %v579 = vunpack.c.l.b16 %v463
        %v580 = vunpack.c.h.b16 %v463
        %v581 = vunpack.c.l.b16 %v464
        %v582 = vunpack.c.h.b16 %v464
        %v583 = vunpack.c.l.b16 %v465
        %v584 = vunpack.c.h.b16 %v465
        %v585 = vunpack.c.l.b16 %v466
        %v586 = vunpack.c.h.b16 %v466
        %v587 = vunpack.c.l.b16 %v467
        %v588 = vunpack.c.h.b16 %v467
        %v589 = vunpack.c.l.b16 %v468
        %v590 = vunpack.c.h.b16 %v468
        %v591 = vunpack.c.l.b16 %v469
        %v592 = vunpack.c.h.b16 %v469
        %v593 = vunpack.c.l.b16 %v470
        %v594 = vunpack.c.h.b16 %v470
        %v595 = vunpack.c.l.b16 %v471
        %v596 = vunpack.c.h.b16 %v471
        %v597 = vunpack.c.l.b16 %v472
        %v598 = vunpack.c.h.b16 %v472
        %v599 = vunpack.c.l.b16 %v473
        %v600 = vunpack.c.h.b16 %v473
        %v601 = vunpack.c.l.b16 %v474
        %v602 = vunpack.c.h.b16 %v474
        %v603 = vpack.c.b16 %v541, %v539
        %v604 = vpack.c.b16 %v542, %v540
        %v605 = vpack.c.b16 %v545, %v543
        %v606 = vpack.c.b16 %v546, %v544
        %v607 = vpack.c.b16 %v549, %v547
        %v608 = vpack.c.b16 %v550, %v548
        %v609 = vpack.c.b16 %v553, %v551
        %v610 = vpack.c.b16 %v554, %v552
        %v611 = vpack.c.b16 %v557, %v555
        %v612 = vpack.c.b16 %v558, %v556
        %v613 = vpack.c.b16 %v561, %v559
        %v614 = vpack.c.b16 %v562, %v560
        %v615 = vpack.c.b16 %v565, %v563
        %v616 = vpack.c.b16 %v566, %v564
        %v617 = vpack.c.b16 %v569, %v567
        %v618 = vpack.c.b16 %v570, %v568
        %v619 = vpack.c.b16 %v573, %v571
        %v620 = vpack.c.b16 %v574, %v572
        %v621 = vpack.c.b16 %v577, %v575
        %v622 = vpack.c.b16 %v578, %v576
        %v623 = vpack.c.b16 %v581, %v579
        %v624 = vpack.c.b16 %v582, %v580
        %v625 = vpack.c.b16 %v585, %v583
        %v626 = vpack.c.b16 %v586, %v584
        %v627 = vpack.c.b16 %v589, %v587
        %v628 = vpack.c.b16 %v590, %v588
        %v629 = vpack.c.b16 %v593, %v591
        %v630 = vpack.c.b16 %v594, %v592
        %v631 = vpack.c.b16 %v597, %v595
        %v632 = vpack.c.b16 %v598, %v596
        %v633 = vpack.c.b16 %v601, %v599
        %v634 = vpack.c.b16 %v602, %v600
        %v699 = vunpack.c.l.b16 %v475
        %v700 = vunpack.c.l.b16 %v476
        %v701 = vunpack.c.l.b16 %v477
        %v702 = vunpack.c.l.b16 %v478
        %v703 = vunpack.c.l.b16 %v479
        %v704 = vunpack.c.l.b16 %v480
        %v705 = vunpack.c.l.b16 %v481
        %v706 = vunpack.c.l.b16 %v482
        %v707 = vunpack.c.l.b16 %v483
        %v708 = vunpack.c.l.b16 %v484
        %v709 = vunpack.c.l.b16 %v485
        %v710 = vunpack.c.l.b16 %v486
        %v711 = vunpack.c.l.b16 %v487
        %v712 = vunpack.c.l.b16 %v488
        %v713 = vunpack.c.l.b16 %v489
        %v714 = vunpack.c.l.b16 %v490
        %v715 = vunpack.c.l.b16 %v491
        %v716 = vunpack.c.l.b16 %v492
        %v717 = vunpack.c.l.b16 %v493
        %v718 = vunpack.c.l.b16 %v494
        %v719 = vunpack.c.l.b16 %v495
        %v720 = vunpack.c.l.b16 %v496
        %v721 = vunpack.c.l.b16 %v497
        %v722 = vunpack.c.l.b16 %v498
        %v723 = vunpack.c.l.b16 %v499
        %v724 = vunpack.c.l.b16 %v500
        %v725 = vunpack.c.l.b16 %v501
        %v726 = vunpack.c.l.b16 %v502
        %v727 = vunpack.c.l.b16 %v503
        %v728 = vunpack.c.l.b16 %v504
        %v729 = vunpack.c.l.b16 %v505
        %v730 = vunpack.c.l.b16 %v506
        %v731 = vpack.c.b16 %v700, %v699
        %v732 = vpack.c.b16 %v702, %v701
        %v733 = vpack.c.b16 %v704, %v703
        %v734 = vpack.c.b16 %v706, %v705
        %v735 = vpack.c.b16 %v708, %v707
        %v736 = vpack.c.b16 %v710, %v709
        %v737 = vpack.c.b16 %v712, %v711
        %v738 = vpack.c.b16 %v714, %v713
        %v739 = vpack.c.b16 %v716, %v715
        %v740 = vpack.c.b16 %v718, %v717
        %v741 = vpack.c.b16 %v720, %v719
        %v742 = vpack.c.b16 %v722, %v721
        %v743 = vpack.c.b16 %v724, %v723
        %v744 = vpack.c.b16 %v726, %v725
        %v745 = vpack.c.b16 %v728, %v727
        %v746 = vpack.c.b16 %v730, %v729
        %763 = vmatprep.subr.bf16.mxu0 0
        %764 = vmatpush1.bf16.msra.mxu0 %v731
        %765 = vmatprep.subr.bf16.mxu0 0
        %766 = vmatpush1.bf16.msra.mxu0 %v732
        %767 = vmatprep.subr.bf16.mxu0 0
        %768 = vmatpush1.bf16.msra.mxu0 %v733
        %769 = vmatprep.subr.bf16.mxu0 0
        %770 = vmatpush1.bf16.msra.mxu0 %v734
        %771 = vmatprep.subr.bf16.mxu0 0
        %772 = vmatpush1.bf16.msra.mxu0 %v735
        %773 = vmatprep.subr.bf16.mxu0 0
        %774 = vmatpush1.bf16.msra.mxu0 %v736
        %775 = vmatprep.subr.bf16.mxu0 0
        %776 = vmatpush1.bf16.msra.mxu0 %v737
        %777 = vmatprep.subr.bf16.mxu0 0
        %778 = vmatpush1.bf16.msra.mxu0 %v738
        %779 = vmatprep.subr.bf16.mxu0 0
        %780 = vmatpush1.bf16.msra.mxu0 %v739
        %781 = vmatprep.subr.bf16.mxu0 0
        %782 = vmatpush1.bf16.msra.mxu0 %v740
        %783 = vmatprep.subr.bf16.mxu0 0
        %784 = vmatpush1.bf16.msra.mxu0 %v741
        %785 = vmatprep.subr.bf16.mxu0 0
        %786 = vmatpush1.bf16.msra.mxu0 %v742
        %787 = vmatprep.subr.bf16.mxu0 0
        %788 = vmatpush1.bf16.msra.mxu0 %v743
        %789 = vmatprep.subr.bf16.mxu0 0
        %790 = vmatpush1.bf16.msra.mxu0 %v744
        %791 = vmatprep.subr.bf16.mxu0 0
        %792 = vmatpush1.bf16.msra.mxu0 %v745
        %793 = vmatprep.subr.bf16.mxu0 0
        %794 = vmatpush1.bf16.msra.mxu0 %v746
        %795 = vmatprep.mubr.bf16.mxu0 %v604
        %796 = vmatmul.mubr.bf16.gmra.mrb[0].mxu0 %v603
        %v797 = vpop.f32.mrb[0].mxu0
        %v798 = vadd.f32 0.0, %v797
        %v799 = vpop.f32.mrb[0].mxu0
        %v800 = vpop.f32.mrb[0].mxu0
        %v801 = vadd.f32 0.0, %v800
        %v802 = vpop.f32.mrb[0].mxu0
        %803 = vmatprep.mubr.bf16.mxu0 %v606
        %804 = vmatmul.mubr.bf16.gmra.mrb[0].mxu0 %v605
        %v805 = vpop.f32.mrb[0].mxu0
        %v806 = vadd.f32 0.0, %v805
        %v807 = vpop.f32.mrb[0].mxu0
        %v808 = vpop.f32.mrb[0].mxu0
        %v809 = vadd.f32 0.0, %v808
        %v810 = vpop.f32.mrb[0].mxu0
        %811 = vmatprep.mubr.bf16.mxu0 %v608
        %812 = vmatmul.mubr.bf16.gmra.mrb[0].mxu0 %v607
        %v813 = vpop.f32.mrb[0].mxu0
        %v814 = vadd.f32 0.0, %v813
        %v815 = vpop.f32.mrb[0].mxu0
        %v816 = vpop.f32.mrb[0].mxu0
        %v817 = vadd.f32 0.0, %v816
        %v818 = vpop.f32.mrb[0].mxu0
        %819 = vmatprep.mubr.bf16.mxu0 %v610
        %820 = vmatmul.mubr.bf16.gmra.mrb[0].mxu0 %v609
        %v821 = vpop.f32.mrb[0].mxu0
        %v822 = vadd.f32 0.0, %v821
        %v823 = vpop.f32.mrb[0].mxu0
        %v824 = vpop.f32.mrb[0].mxu0
        %v825 = vadd.f32 0.0, %v824
        %v826 = vpop.f32.mrb[0].mxu0
        %827 = vmatprep.mubr.bf16.mxu0 %v612
        %828 = vmatmul.mubr.bf16.gmra.mrb[0].mxu0 %v611
        %v829 = vpop.f32.mrb[0].mxu0
        %v830 = vadd.f32 0.0, %v829
        %v831 = vpop.f32.mrb[0].mxu0
        %v832 = vpop.f32.mrb[0].mxu0
        %v833 = vadd.f32 0.0, %v832
        %v834 = vpop.f32.mrb[0].mxu0
        %835 = vmatprep.mubr.bf16.mxu0 %v614
        %836 = vmatmul.mubr.bf16.gmra.mrb[0].mxu0 %v613
        %v837 = vpop.f32.mrb[0].mxu0
        %v838 = vadd.f32 0.0, %v837
        %v839 = vpop.f32.mrb[0].mxu0
        %v840 = vpop.f32.mrb[0].mxu0
        %v841 = vadd.f32 0.0, %v840
        %v842 = vpop.f32.mrb[0].mxu0
        %843 = vmatprep.mubr.bf16.mxu0 %v616
        %844 = vmatmul.mubr.bf16.gmra.mrb[0].mxu0 %v615
        %v845 = vpop.f32.mrb[0].mxu0
        %v846 = vadd.f32 0.0, %v845
        %v847 = vpop.f32.mrb[0].mxu0
        %v848 = vpop.f32.mrb[0].mxu0
        %v849 = vadd.f32 0.0, %v848
        %v850 = vpop.f32.mrb[0].mxu0
        %851 = vmatprep.mubr.bf16.mxu0 %v618
        %852 = vmatmul.mubr.bf16.gmra.mrb[0].mxu0 %v617
        %v853 = vpop.f32.mrb[0].mxu0
        %v854 = vadd.f32 0.0, %v853
        %v855 = vpop.f32.mrb[0].mxu0
        %v856 = vpop.f32.mrb[0].mxu0
        %v857 = vadd.f32 0.0, %v856
        %v858 = vpop.f32.mrb[0].mxu0
        %859 = vmatprep.mubr.bf16.mxu0 %v620
        %860 = vmatmul.mubr.bf16.gmra.mrb[0].mxu0 %v619
        %v861 = vpop.f32.mrb[0].mxu0
        %v862 = vadd.f32 0.0, %v861
        %v863 = vpop.f32.mrb[0].mxu0
        %v864 = vpop.f32.mrb[0].mxu0
        %v865 = vadd.f32 0.0, %v864
        %v866 = vpop.f32.mrb[0].mxu0
        %867 = vmatprep.mubr.bf16.mxu0 %v622
        %868 = vmatmul.mubr.bf16.gmra.mrb[0].mxu0 %v621
        %v869 = vpop.f32.mrb[0].mxu0
        %v870 = vadd.f32 0.0, %v869
        %v871 = vpop.f32.mrb[0].mxu0
        %v872 = vpop.f32.mrb[0].mxu0
        %v873 = vadd.f32 0.0, %v872
        %v874 = vpop.f32.mrb[0].mxu0
        %875 = vmatprep.mubr.bf16.mxu0 %v624
        %876 = vmatmul.mubr.bf16.gmra.mrb[0].mxu0 %v623
        %v877 = vpop.f32.mrb[0].mxu0
        %v878 = vadd.f32 0.0, %v877
        %v879 = vpop.f32.mrb[0].mxu0
        %v880 = vpop.f32.mrb[0].mxu0
        %v881 = vadd.f32 0.0, %v880
        %v882 = vpop.f32.mrb[0].mxu0
        %883 = vmatprep.mubr.bf16.mxu0 %v626
        %884 = vmatmul.mubr.bf16.gmra.mrb[0].mxu0 %v625
        %v885 = vpop.f32.mrb[0].mxu0
        %v886 = vadd.f32 0.0, %v885
        %v887 = vpop.f32.mrb[0].mxu0
        %v888 = vpop.f32.mrb[0].mxu0
        %v889 = vadd.f32 0.0, %v888
        %v890 = vpop.f32.mrb[0].mxu0
        %891 = vmatprep.mubr.bf16.mxu0 %v628
        %892 = vmatmul.mubr.bf16.gmra.mrb[0].mxu0 %v627
        %v893 = vpop.f32.mrb[0].mxu0
        %v894 = vadd.f32 0.0, %v893
        %v895 = vpop.f32.mrb[0].mxu0
        %v896 = vpop.f32.mrb[0].mxu0
        %v897 = vadd.f32 0.0, %v896
        %v898 = vpop.f32.mrb[0].mxu0
        %899 = vmatprep.mubr.bf16.mxu0 %v630
        %900 = vmatmul.mubr.bf16.gmra.mrb[0].mxu0 %v629
        %v901 = vpop.f32.mrb[0].mxu0
        %v902 = vadd.f32 0.0, %v901
        %v903 = vpop.f32.mrb[0].mxu0
        %v904 = vpop.f32.mrb[0].mxu0
        %v905 = vadd.f32 0.0, %v904
        %v906 = vpop.f32.mrb[0].mxu0
        %907 = vmatprep.mubr.bf16.mxu0 %v632
        %908 = vmatmul.mubr.bf16.gmra.mrb[0].mxu0 %v631
        %v909 = vpop.f32.mrb[0].mxu0
        %v910 = vadd.f32 0.0, %v909
        %v911 = vpop.f32.mrb[0].mxu0
        %v912 = vpop.f32.mrb[0].mxu0
        %v913 = vadd.f32 0.0, %v912
        %v914 = vpop.f32.mrb[0].mxu0
        %915 = vmatprep.mubr.bf16.mxu0 %v634
        %916 = vmatmul.mubr.bf16.gmra.mrb[0].mxu0 %v633
        %v917 = vpop.f32.mrb[0].mxu0
        %v918 = vadd.f32 0.0, %v917
        %v919 = vpop.f32.mrb[0].mxu0
        %v920 = vpop.f32.mrb[0].mxu0
        %v921 = vadd.f32 0.0, %v920
        %v922 = vpop.f32.mrb[0].mxu0
        %923 = vdwg.mxu0
        %v924 = vadd.f32 %v411, %v798
        %v925 = vadd.f32 %v412, %v801
        %v926 = vadd.f32 %v413, %v806
        %v927 = vadd.f32 %v414, %v809
        %v928 = vadd.f32 %v415, %v814
        %v929 = vadd.f32 %v416, %v817
        %v930 = vadd.f32 %v417, %v822
        %v931 = vadd.f32 %v418, %v825
        %v932 = vadd.f32 %v419, %v830
        %v933 = vadd.f32 %v420, %v833
        %v934 = vadd.f32 %v421, %v838
        %v935 = vadd.f32 %v422, %v841
        %v936 = vadd.f32 %v423, %v846
        %v937 = vadd.f32 %v424, %v849
        %v938 = vadd.f32 %v425, %v854
        %v939 = vadd.f32 %v426, %v857
        %v940 = vadd.f32 %v427, %v862
        %v941 = vadd.f32 %v428, %v865
        %v942 = vadd.f32 %v429, %v870
        %v943 = vadd.f32 %v430, %v873
        %v944 = vadd.f32 %v431, %v878
        %v945 = vadd.f32 %v432, %v881
        %v946 = vadd.f32 %v433, %v886
        %v947 = vadd.f32 %v434, %v889
        %v948 = vadd.f32 %v435, %v894
        %v949 = vadd.f32 %v436, %v897
        %v950 = vadd.f32 %v437, %v902
        %v951 = vadd.f32 %v438, %v905
        %v952 = vadd.f32 %v439, %v910
        %v953 = vadd.f32 %v440, %v913
        %v954 = vadd.f32 %v441, %v918
        %v955 = vadd.f32 %v442, %v921
        %vm956 = vcmask 7168
        %957 = vst.msk [vmem:[%s371] sm:$0xff] %vm956, %v924
        %958 = vst.msk [vmem:[%s371 + $0x8] sm:$0xff] %vm956, %v925
        %959 = vst.msk [vmem:[%s371 + $0x10] sm:$0xff] %vm956, %v926
        %960 = vst.msk [vmem:[%s371 + $0x18] sm:$0xff] %vm956, %v927
        %961 = vst.msk [vmem:[%s371 + $0x20] sm:$0xff] %vm956, %v928
        %962 = vst.msk [vmem:[%s371 + $0x28] sm:$0xff] %vm956, %v929
        %963 = vst.msk [vmem:[%s371 + $0x30] sm:$0xff] %vm956, %v930
        %964 = vst.msk [vmem:[%s371 + $0x38] sm:$0xff] %vm956, %v931
        %965 = vst.msk [vmem:[%s371 + $0x40] sm:$0xff] %vm956, %v932
        %966 = vst.msk [vmem:[%s371 + $0x48] sm:$0xff] %vm956, %v933
        %967 = vst.msk [vmem:[%s371 + $0x50] sm:$0xff] %vm956, %v934
        %968 = vst.msk [vmem:[%s371 + $0x58] sm:$0xff] %vm956, %v935
        %969 = vst.msk [vmem:[%s371 + $0x60] sm:$0xff] %vm956, %v936
        %970 = vst.msk [vmem:[%s371 + $0x68] sm:$0xff] %vm956, %v937
        %971 = vst.msk [vmem:[%s371 + $0x70] sm:$0xff] %vm956, %v938
        %972 = vst.msk [vmem:[%s371 + $0x78] sm:$0xff] %vm956, %v939
        %973 = vst.msk [vmem:[%s371 + $0x80] sm:$0xff] %vm956, %v940
        %974 = vst.msk [vmem:[%s371 + $0x88] sm:$0xff] %vm956, %v941
        %975 = vst.msk [vmem:[%s371 + $0x90] sm:$0xff] %vm956, %v942
        %976 = vst.msk [vmem:[%s371 + $0x98] sm:$0xff] %vm956, %v943
        %977 = vst.msk [vmem:[%s371 + $0xa0] sm:$0xff] %vm956, %v944
        %978 = vst.msk [vmem:[%s371 + $0xa8] sm:$0xff] %vm956, %v945
        %979 = vst.msk [vmem:[%s371 + $0xb0] sm:$0xff] %vm956, %v946
        %980 = vst.msk [vmem:[%s371 + $0xb8] sm:$0xff] %vm956, %v947
        %981 = vst.msk [vmem:[%s371 + $0xc0] sm:$0xff] %vm956, %v948
        %982 = vst.msk [vmem:[%s371 + $0xc8] sm:$0xff] %vm956, %v949
        %983 = vst.msk [vmem:[%s371 + $0xd0] sm:$0xff] %vm956, %v950
        %984 = vst.msk [vmem:[%s371 + $0xd8] sm:$0xff] %vm956, %v951
        %985 = vst.msk [vmem:[%s371 + $0xe0] sm:$0xff] %vm956, %v952
        %986 = vst.msk [vmem:[%s371 + $0xe8] sm:$0xff] %vm956, %v953
        %987 = vst.msk [vmem:[%s371 + $0xf0] sm:$0xff] %vm956, %v954
        %988 = vst.msk [vmem:[%s371 + $0xf8] sm:$0xff] %vm956, %v955
        %p989 = scmp.eq.s32.totalorder %s20, 1
        // Predicated region
        $region75: #{gcn_forward.3} parent=65 // pred_check
          %p990 = pneg %p989
        $region76: #{gcn_forward.3} parent=65 // pred_check_branch
          %992 = sbr.rel (%p990) target = $region78
        $region77: #{gcn_forward.3} parent=65 // pred_region
          %v993 = vld [vmem:[%s371] sm:$0xff]
          %v994 = vld [vmem:[%s371 + $0x8] sm:$0xff]
          %v995 = vld [vmem:[%s371 + $0x10] sm:$0xff]
          %v996 = vld [vmem:[%s371 + $0x18] sm:$0xff]
          %v997 = vld [vmem:[%s371 + $0x20] sm:$0xff]
          %v998 = vld [vmem:[%s371 + $0x28] sm:$0xff]
          %v999 = vld [vmem:[%s371 + $0x30] sm:$0xff]
          %v1000 = vld [vmem:[%s371 + $0x38] sm:$0xff]
          %v1001 = vld [vmem:[%s371 + $0x40] sm:$0xff]
          %v1002 = vld [vmem:[%s371 + $0x48] sm:$0xff]
          %v1003 = vld [vmem:[%s371 + $0x50] sm:$0xff]
          %v1004 = vld [vmem:[%s371 + $0x58] sm:$0xff]
          %v1005 = vld [vmem:[%s371 + $0x60] sm:$0xff]
          %v1006 = vld [vmem:[%s371 + $0x68] sm:$0xff]
          %v1007 = vld [vmem:[%s371 + $0x70] sm:$0xff]
          %v1008 = vld [vmem:[%s371 + $0x78] sm:$0xff]
          %v1009 = vld [vmem:[%s371 + $0x80] sm:$0xff]
          %v1010 = vld [vmem:[%s371 + $0x88] sm:$0xff]
          %v1011 = vld [vmem:[%s371 + $0x90] sm:$0xff]
          %v1012 = vld [vmem:[%s371 + $0x98] sm:$0xff]
          %v1013 = vld [vmem:[%s371 + $0xa0] sm:$0xff]
          %v1014 = vld [vmem:[%s371 + $0xa8] sm:$0xff]
          %v1015 = vld [vmem:[%s371 + $0xb0] sm:$0xff]
          %v1016 = vld [vmem:[%s371 + $0xb8] sm:$0xff]
          %v1017 = vld [vmem:[%s371 + $0xc0] sm:$0xff]
          %v1018 = vld [vmem:[%s371 + $0xc8] sm:$0xff]
          %v1019 = vld [vmem:[%s371 + $0xd0] sm:$0xff]
          %v1020 = vld [vmem:[%s371 + $0xd8] sm:$0xff]
          %v1021 = vld [vmem:[%s371 + $0xe0] sm:$0xff]
          %v1022 = vld [vmem:[%s371 + $0xe8] sm:$0xff]
          %v1023 = vld [vmem:[%s371 + $0xf0] sm:$0xff]
          %v1024 = vld [vmem:[%s371 + $0xf8] sm:$0xff]
          %s1025 = sld [smem:[#allocation2]]
          %v1026 = vstv %s1025
          %v1027 = vadd.f32 %v993, %v1026
          %v1028 = vadd.f32 %v994, %v1026
          %v1029 = vadd.f32 %v995, %v1026
          %v1030 = vadd.f32 %v996, %v1026
          %v1031 = vadd.f32 %v997, %v1026
          %v1032 = vadd.f32 %v998, %v1026
          %v1033 = vadd.f32 %v999, %v1026
          %v1034 = vadd.f32 %v1000, %v1026
          %v1035 = vadd.f32 %v1001, %v1026
          %v1036 = vadd.f32 %v1002, %v1026
          %v1037 = vadd.f32 %v1003, %v1026
          %v1038 = vadd.f32 %v1004, %v1026
          %v1039 = vadd.f32 %v1005, %v1026
          %v1040 = vadd.f32 %v1006, %v1026
          %v1041 = vadd.f32 %v1007, %v1026
          %v1042 = vadd.f32 %v1008, %v1026
          %v1043 = vadd.f32 %v1009, %v1026
          %v1044 = vadd.f32 %v1010, %v1026
          %v1045 = vadd.f32 %v1011, %v1026
          %v1046 = vadd.f32 %v1012, %v1026
          %v1047 = vadd.f32 %v1013, %v1026
          %v1048 = vadd.f32 %v1014, %v1026
          %v1049 = vadd.f32 %v1015, %v1026
          %v1050 = vadd.f32 %v1016, %v1026
          %v1051 = vadd.f32 %v1017, %v1026
          %v1052 = vadd.f32 %v1018, %v1026
          %v1053 = vadd.f32 %v1019, %v1026
          %v1054 = vadd.f32 %v1020, %v1026
          %v1055 = vadd.f32 %v1021, %v1026
          %v1056 = vadd.f32 %v1022, %v1026
          %v1057 = vadd.f32 %v1023, %v1026
          %v1058 = vadd.f32 %v1024, %v1026
          %1059 = vst.msk [vmem:[%s371] sm:$0xff] %vm956, %v1027
          %1060 = vst.msk [vmem:[%s371 + $0x8] sm:$0xff] %vm956, %v1028
          %1061 = vst.msk [vmem:[%s371 + $0x10] sm:$0xff] %vm956, %v1029
          %1062 = vst.msk [vmem:[%s371 + $0x18] sm:$0xff] %vm956, %v1030
          %1063 = vst.msk [vmem:[%s371 + $0x20] sm:$0xff] %vm956, %v1031
          %1064 = vst.msk [vmem:[%s371 + $0x28] sm:$0xff] %vm956, %v1032
          %1065 = vst.msk [vmem:[%s371 + $0x30] sm:$0xff] %vm956, %v1033
          %1066 = vst.msk [vmem:[%s371 + $0x38] sm:$0xff] %vm956, %v1034
          %1067 = vst.msk [vmem:[%s371 + $0x40] sm:$0xff] %vm956, %v1035
          %1068 = vst.msk [vmem:[%s371 + $0x48] sm:$0xff] %vm956, %v1036
          %1069 = vst.msk [vmem:[%s371 + $0x50] sm:$0xff] %vm956, %v1037
          %1070 = vst.msk [vmem:[%s371 + $0x58] sm:$0xff] %vm956, %v1038
          %1071 = vst.msk [vmem:[%s371 + $0x60] sm:$0xff] %vm956, %v1039
          %1072 = vst.msk [vmem:[%s371 + $0x68] sm:$0xff] %vm956, %v1040
          %1073 = vst.msk [vmem:[%s371 + $0x70] sm:$0xff] %vm956, %v1041
          %1074 = vst.msk [vmem:[%s371 + $0x78] sm:$0xff] %vm956, %v1042
          %1075 = vst.msk [vmem:[%s371 + $0x80] sm:$0xff] %vm956, %v1043
          %1076 = vst.msk [vmem:[%s371 + $0x88] sm:$0xff] %vm956, %v1044
          %1077 = vst.msk [vmem:[%s371 + $0x90] sm:$0xff] %vm956, %v1045
          %1078 = vst.msk [vmem:[%s371 + $0x98] sm:$0xff] %vm956, %v1046
          %1079 = vst.msk [vmem:[%s371 + $0xa0] sm:$0xff] %vm956, %v1047
          %1080 = vst.msk [vmem:[%s371 + $0xa8] sm:$0xff] %vm956, %v1048
          %1081 = vst.msk [vmem:[%s371 + $0xb0] sm:$0xff] %vm956, %v1049
          %1082 = vst.msk [vmem:[%s371 + $0xb8] sm:$0xff] %vm956, %v1050
          %1083 = vst.msk [vmem:[%s371 + $0xc0] sm:$0xff] %vm956, %v1051
          %1084 = vst.msk [vmem:[%s371 + $0xc8] sm:$0xff] %vm956, %v1052
          %1085 = vst.msk [vmem:[%s371 + $0xd0] sm:$0xff] %vm956, %v1053
          %1086 = vst.msk [vmem:[%s371 + $0xd8] sm:$0xff] %vm956, %v1054
          %1087 = vst.msk [vmem:[%s371 + $0xe0] sm:$0xff] %vm956, %v1055
          %1088 = vst.msk [vmem:[%s371 + $0xe8] sm:$0xff] %vm956, %v1056
          %1089 = vst.msk [vmem:[%s371 + $0xf0] sm:$0xff] %vm956, %v1057
          %1090 = vst.msk [vmem:[%s371 + $0xf8] sm:$0xff] %vm956, %v1058
        $region78: #{gcn_forward.3} parent=65 // pred_fallthru
          _
        %s1091 = smul.u32 32, %s19
        %p1092 = scmp.lt.s32.totalorder %s1091, 63
        %s1093 = scalar_select %p1092, %s1091, 63
        %s1094 = smul.addr %s1093, 8
        %s1095 = scalar_lea.vmem %s3, %s1094
        // Predicated region
        $region79: #{gcn_forward.3} parent=65 // pred_check
          %p1096 = pneg %p120
        $region80: #{gcn_forward.3} parent=65 // pred_check_branch
          %1098 = sbr.rel (%p1096) target = $region82
        $region81: #{gcn_forward.3} parent=65 // pred_region
          %s1099 = smul.u32 32, %s19
        $region82: #{gcn_forward.3} parent=65 // pred_fallthru
          _
      $region66: #{gcn_forward.3} parent=5 // pred_fallthru
        _
      %p1100 = scmp.le.s32.totalorder 2, %s10
      // Predicated region
      $region83: #{gcn_forward.3} parent=5 // pred_check
        %p1101 = pneg %p1100
      $region84: #{gcn_forward.3} parent=5 // pred_check_branch
        %1103 = sbr.rel (%p1101) target = $region86
      $region85: #{gcn_forward.3} parent=5 // pred_region
        %s1104 = ssub.s32 %s10, 2
        // Predicated region
        $region87: #{gcn_forward.3} parent=85 // pred_check
          %p1105 = pneg %p126
        $region88: #{gcn_forward.3} parent=85 // pred_check_branch
          %1107 = sbr.rel (%p1105) target = $region90
        $region89: #{gcn_forward.3} parent=85 // pred_region
          %s1108 = smul.u32 32, %s21
          %p1109 = scmp.lt.s32.totalorder %s1108, 63
          %s1110 = scalar_select %p1109, %s1108, 63
          %s1111 = smul.addr %s1110, 8
          %s1112 = scalar_lea.vmem %s3, %s1111
        $region90: #{gcn_forward.3} parent=85 // pred_fallthru
          _
      $region86: #{gcn_forward.3} parent=5 // pred_fallthru
        _
    $region6: #{gcn_forward.3} parent=1 // loop_footer
      %s14 = sadd.s32 1, %s10
    $region7: #{gcn_forward.3} parent=1 // loop_footer_branch
      %9 = sbr.rel target = $region3
    $region8: #{gcn_forward.3} parent=1 // loop_exit
      _

// kernel: gcn_forward.2
$region0: #{gcn_forward.2}
  #allocation0 [shape = 'u32[]', space=smem, size = 0x4, offset = 0x4, fixed_abs, tag = 'smem constant byte address 0x4 - core index']
  #allocation1 [shape = 'u32[144,128]{1,0:T(1,128)}', space=vmem, size = 0x12000, scoped, tag = 'internal scratch']
  #allocation2 [shape = 'f32[256,16]{1,0:T(8,128)}', space=vmem, size = 0x20000, scoped, tag = 'scratch operand']
  %s0 = inlined_call_operand.vmem [shape: bf16[512,512], index: 0, kind: input, shape index: {}]
  %s1 = inlined_call_operand.vmem [shape: bf16[512,1], index: 1, kind: input, shape index: {}]
  %s2 = inlined_call_operand.vmem [shape: f32[1,16], index: 2, kind: input, shape index: {}]
  %s3 = inlined_call_operand.vmem [shape: f32[1,16], index: 3, kind: input, shape index: {}]
  %s4 = inlined_call_operand.vmem [shape: f32[1,16], index: 4, kind: input, shape index: {}]
  %s5 = inlined_call_operand.vmem [shape: f32[512,1], index: 5, kind: output, shape index: {}]
  %s6 = sld [smem:[#allocation0]]
  $region99: #{gcn_forward.2} parent=0
    _
  %s8 = ssub.s32 1, %s6
  %s9 = scalar_select 0, %s8, %s6
  $region1: #{gcn_forward.2} parent=0
    #allocation3 [shape = 'u8[262144]{0}', space=vmem, size = 0x40000, scoped, tag = 'input window, operand 0']
    loop: start=0, step=1, limit=6
    $region2: #{gcn_forward.2} parent=1 // loop_pre_header
      _
    $region3: #{gcn_forward.2} parent=1 // loop_header
      %s11 = sphi 0, %s15
      %p12 = scmp.ge.s32.totalorder %s11, 6
      %s18 = sphi 0, %s30
      %s19 = sphi 0, %s26
      %s20 = sphi 0, %s18
      %s21 = sphi 0, %s19
      %s22 = sphi 0, %s20
      %s23 = sphi 0, %s21
      %s35 = sphi 0, %s37
      %s38 = sphi 0, %s35
      %s39 = sphi 0, %s38
      %s55 = sphi 0, %s39
      %s61 = sphi 0, %s63
      %s64 = sphi 0, %s61
      %s65 = sphi 0, %s64
      %s81 = sphi 0, %s65
      %s85 = sphi 0, %s85
      %s87 = sphi 0, %s85
      %s88 = sphi 0, %s87
      %s102 = sphi 0, %s88
      %s106 = sphi 0, %s106
      %s108 = sphi 0, %s106
      %s109 = sphi 0, %s108
      %s123 = sphi 0, %s109
      %s127 = sphi 0, %s127
      %s129 = sphi 0, %s127
      %s130 = sphi 0, %s129
      %s144 = sphi 0, %s130
      %s150 = sphi 0, %s152
      %s153 = sphi 0, %s150
      %s154 = sphi 0, %s153
      %s170 = sphi 0, %s154
    $region4: #{gcn_forward.2} parent=1 // loop_header_branch
      %14 = sbr.rel (%p12) target = $region8
    $region5: #{gcn_forward.2} parent=1 // loop_body
      %s16 = ssub.s32 %s11, 1
      %s17 = ssub.s32 %s11, 2
      %s24 = sadd.s32 1, %s19
      %p25 = scmp.ge.s32.totalorder %s24, 2
      %s26 = scalar_select %p25, 0, %s24
      %s27 = sadd.s32 1, %s18
      %s28 = scalar_select %p25, %s27, %s18
      %p29 = scmp.ge.s32.totalorder %s28, 2
      %s30 = scalar_select %p29, 0, %s28
      %s31 = ssub.s32 %s18, %s30
      %s32 = ssub.s32 %s19, %s26
      %s33 = sor.u32 %s31, %s32
      %p34 = scmp.eq.s32.totalorder %s33, 0
      %s36 = sadd.s32 %s35, 1
      %s37 = scalar_select %p34, %s35, %s36
      %p40 = pneg %p34
      %p41 = scmp.eq.s32.totalorder %s11, 3
      %p42 = por %p40, %p41
      %p43 = scmp.ne.s32.totalorder %s35, %s38
      %p44 = scmp.eq.s32.totalorder %s11, 0
      %p45 = por %p43, %p44
      %p46 = scmp.ne.s32.totalorder %s35, %s38
      %p47 = scmp.eq.s32.totalorder %s16, 3
      %p48 = por %p46, %p47
      %p49 = scmp.ne.s32.totalorder %s38, %s39
      %p50 = scmp.eq.s32.totalorder %s16, 0
      %p51 = por %p49, %p50
      %p52 = scmp.ne.s32.totalorder %s38, %s39
      %p53 = scmp.eq.s32.totalorder %s17, 3
      %p54 = por %p52, %p53
      %p56 = scmp.ne.s32.totalorder %s39, %s55
      %p57 = scmp.eq.s32.totalorder %s17, 0
      %p58 = por %p56, %p57
      %s59 = ssub.s32 %s19, %s26
      %p60 = scmp.eq.s32.totalorder %s59, 0
      %s62 = sadd.s32 %s61, 1
      %s63 = scalar_select %p60, %s61, %s62
      %p66 = pneg %p60
      %p67 = scmp.eq.s32.totalorder %s11, 3
      %p68 = por %p66, %p67
      %p69 = scmp.ne.s32.totalorder %s61, %s64
      %p70 = scmp.eq.s32.totalorder %s11, 0
      %p71 = por %p69, %p70
      %p72 = scmp.ne.s32.totalorder %s61, %s64
      %p73 = scmp.eq.s32.totalorder %s16, 3
      %p74 = por %p72, %p73
      %p75 = scmp.ne.s32.totalorder %s64, %s65
      %p76 = scmp.eq.s32.totalorder %s16, 0
      %p77 = por %p75, %p76
      %p78 = scmp.ne.s32.totalorder %s64, %s65
      %p79 = scmp.eq.s32.totalorder %s17, 3
      %p80 = por %p78, %p79
      %p82 = scmp.ne.s32.totalorder %s65, %s81
      %p83 = scmp.eq.s32.totalorder %s17, 0
      %p84 = por %p82, %p83
      %s86 = sadd.s32 %s85, 1
      %p89 = scmp.eq.s32.totalorder %s11, 3
      %p90 = scmp.ne.s32.totalorder %s85, %s87
      %p91 = scmp.eq.s32.totalorder %s11, 0
      %p92 = por %p90, %p91
      %p93 = scmp.ne.s32.totalorder %s85, %s87
      %p94 = scmp.eq.s32.totalorder %s16, 3
      %p95 = por %p93, %p94
      %p96 = scmp.ne.s32.totalorder %s87, %s88
      %p97 = scmp.eq.s32.totalorder %s16, 0
      %p98 = por %p96, %p97
      %p99 = scmp.ne.s32.totalorder %s87, %s88
      %p100 = scmp.eq.s32.totalorder %s17, 3
      %p101 = por %p99, %p100
      %p103 = scmp.ne.s32.totalorder %s88, %s102
      %p104 = scmp.eq.s32.totalorder %s17, 0
      %p105 = por %p103, %p104
      %s107 = sadd.s32 %s106, 1
      %p110 = scmp.eq.s32.totalorder %s11, 3
      %p111 = scmp.ne.s32.totalorder %s106, %s108
      %p112 = scmp.eq.s32.totalorder %s11, 0
      %p113 = por %p111, %p112
      %p114 = scmp.ne.s32.totalorder %s106, %s108
      %p115 = scmp.eq.s32.totalorder %s16, 3
      %p116 = por %p114, %p115
      %p117 = scmp.ne.s32.totalorder %s108, %s109
      %p118 = scmp.eq.s32.totalorder %s16, 0
      %p119 = por %p117, %p118
      %p120 = scmp.ne.s32.totalorder %s108, %s109
      %p121 = scmp.eq.s32.totalorder %s17, 3
      %p122 = por %p120, %p121
      %p124 = scmp.ne.s32.totalorder %s109, %s123
      %p125 = scmp.eq.s32.totalorder %s17, 0
      %p126 = por %p124, %p125
      %s128 = sadd.s32 %s127, 1
      %p131 = scmp.eq.s32.totalorder %s11, 3
      %p132 = scmp.ne.s32.totalorder %s127, %s129
      %p133 = scmp.eq.s32.totalorder %s11, 0
      %p134 = por %p132, %p133
      %p135 = scmp.ne.s32.totalorder %s127, %s129
      %p136 = scmp.eq.s32.totalorder %s16, 3
      %p137 = por %p135, %p136
      %p138 = scmp.ne.s32.totalorder %s129, %s130
      %p139 = scmp.eq.s32.totalorder %s16, 0
      %p140 = por %p138, %p139
      %p141 = scmp.ne.s32.totalorder %s129, %s130
      %p142 = scmp.eq.s32.totalorder %s17, 3
      %p143 = por %p141, %p142
      %p145 = scmp.ne.s32.totalorder %s130, %s144
      %p146 = scmp.eq.s32.totalorder %s17, 0
      %p147 = por %p145, %p146
      %s148 = ssub.s32 %s18, %s30
      %p149 = scmp.eq.s32.totalorder %s148, 0
      %s151 = sadd.s32 %s150, 1
      %s152 = scalar_select %p149, %s150, %s151
      %p155 = pneg %p149
      %p156 = scmp.eq.s32.totalorder %s11, 3
      %p157 = por %p155, %p156
      %p158 = scmp.ne.s32.totalorder %s150, %s153
      %p159 = scmp.eq.s32.totalorder %s11, 0
      %p160 = por %p158, %p159
      %p161 = scmp.ne.s32.totalorder %s150, %s153
      %p162 = scmp.eq.s32.totalorder %s16, 3
      %p163 = por %p161, %p162
      %p164 = scmp.ne.s32.totalorder %s153, %s154
      %p165 = scmp.eq.s32.totalorder %s16, 0
      %p166 = por %p164, %p165
      %p167 = scmp.ne.s32.totalorder %s153, %s154
      %p168 = scmp.eq.s32.totalorder %s17, 3
      %p169 = por %p167, %p168
      %p171 = scmp.ne.s32.totalorder %s154, %s170
      %p172 = scmp.eq.s32.totalorder %s17, 0
      %p173 = por %p171, %p172
      %p174 = scmp.le.s32.totalorder 1, %s11
      %p175 = scmp.lt.s32.totalorder %s11, 5
      %p176 = pnand %p174, %p175
      %p177 = pneg %p176
      // Predicated region
      $region9: #{gcn_forward.2} parent=5 // pred_check
        _
      $region10: #{gcn_forward.2} parent=5 // pred_check_branch
        %179 = sbr.rel (%p176) target = $region12
      $region11: #{gcn_forward.2} parent=5 // pred_region
        %s180 = ssub.s32 %s11, 1
        // Predicated region
        $region13: #{gcn_forward.2} parent=11 // pred_check
          %p181 = pneg %p98
        $region14: #{gcn_forward.2} parent=11 // pred_check_branch
          %183 = sbr.rel (%p181) target = $region16
        $region15: #{gcn_forward.2} parent=11 // pred_region
          _
        $region16: #{gcn_forward.2} parent=11 // pred_fallthru
          _
        // Predicated region
        $region17: #{gcn_forward.2} parent=11 // pred_check
          %p184 = pneg %p119
        $region18: #{gcn_forward.2} parent=11 // pred_check_branch
          %186 = sbr.rel (%p184) target = $region20
        $region19: #{gcn_forward.2} parent=11 // pred_region
          _
        $region20: #{gcn_forward.2} parent=11 // pred_fallthru
          _
        // Predicated region
        $region21: #{gcn_forward.2} parent=11 // pred_check
          %p187 = pneg %p140
        $region22: #{gcn_forward.2} parent=11 // pred_check_branch
          %189 = sbr.rel (%p187) target = $region24
        $region23: #{gcn_forward.2} parent=11 // pred_region
          _
        $region24: #{gcn_forward.2} parent=11 // pred_fallthru
          _
      $region12: #{gcn_forward.2} parent=5 // pred_fallthru
        _
      %p190 = scmp.lt.s32.totalorder %s11, 4
      // Predicated region
      $region25: #{gcn_forward.2} parent=5 // pred_check
        %p191 = pneg %p190
      $region26: #{gcn_forward.2} parent=5 // pred_check_branch
        %193 = sbr.rel (%p191) target = $region28
      $region27: #{gcn_forward.2} parent=5 // pred_region
        // Predicated region
        $region29: #{gcn_forward.2} parent=27 // pred_check
          %p194 = pneg %p45
        $region30: #{gcn_forward.2} parent=27 // pred_check_branch
          %196 = sbr.rel (%p194) target = $region32
        $region31: #{gcn_forward.2} parent=27 // pred_region
          %s197 = sand.u32 %s35, 1
          %s198 = sand.u32 %s35, 1
          %s199 = smul.addr %s198, 256
          %s200 = scalar_lea.vmem [#allocation3], %s199
          %s201 = smul.u32 32, %s18
          %s202 = smul.u32 2, %s19
          %s203 = smul.addr %s201, 4
          %s204 = sadd.s32 %s202, %s203
          %s205 = smul.addr %s204, 4
          %s206 = scalar_lea.vmem %s0, %s205
          // Predicated region
          $region33: #{gcn_forward.2} parent=31 // pred_check
            _
          $region34: #{gcn_forward.2} parent=31 // pred_check_branch
            %208 = sbr.rel (0) target = $region36
          $region35: #{gcn_forward.2} parent=31 // pred_region
            // Predicated region
            $region37: #{gcn_forward.2} parent=35 // pred_check
              _
            $region38: #{gcn_forward.2} parent=35 // pred_check_branch
              %210 = sbr.rel (0) target = $region40
            $region39: #{gcn_forward.2} parent=35 // pred_region
              // Predicated region
              $region52: #{gcn_forward.2} parent=39 // pred_check
                _
              $region53: #{gcn_forward.2} parent=39 // pred_check_branch
                %287 = sbr.rel (0) target = $region55
              $region54: #{gcn_forward.2} parent=39 // pred_region
                loop: start=0, step=1, limit=1
                $region56: #{gcn_forward.2} parent=54 // loop_pre_header
                  _
                $region57: #{gcn_forward.2} parent=54 // loop_header
                  %s289 = sphi 0, %s293
                  %p290 = scmp.ge.s32.totalorder %s289, 1
                  %s294 = sphi %s206, %s206
                  %s295 = sphi %s200, %s200
                $region58: #{gcn_forward.2} parent=54 // loop_header_branch
                  %292 = sbr.rel (%p290) target = $region62
                $region59: #{gcn_forward.2} parent=54 // loop_body
                  %v296 = vld [vmem:[%s294] sm:$0xff]
                  %297 = vst [vmem:[%s295] sm:$0xff] %v296
                  %v298 = vld [vmem:[%s294 + $0x10] sm:$0xff]
                  %299 = vst [vmem:[%s295 + $0x8] sm:$0xff] %v298
                  %v300 = vld [vmem:[%s294 + $0x20] sm:$0xff]
                  %301 = vst [vmem:[%s295 + $0x10] sm:$0xff] %v300
                  %v302 = vld [vmem:[%s294 + $0x30] sm:$0xff]
                  %303 = vst [vmem:[%s295 + $0x18] sm:$0xff] %v302
                  %v304 = vld [vmem:[%s294 + $0x40] sm:$0xff]
                  %305 = vst [vmem:[%s295 + $0x20] sm:$0xff] %v304
                  %v306 = vld [vmem:[%s294 + $0x50] sm:$0xff]
                  %307 = vst [vmem:[%s295 + $0x28] sm:$0xff] %v306
                  %v308 = vld [vmem:[%s294 + $0x60] sm:$0xff]
                  %309 = vst [vmem:[%s295 + $0x30] sm:$0xff] %v308
                  %v310 = vld [vmem:[%s294 + $0x70] sm:$0xff]
                  %311 = vst [vmem:[%s295 + $0x38] sm:$0xff] %v310
                  %v312 = vld [vmem:[%s294 + $0x80] sm:$0xff]
                  %313 = vst [vmem:[%s295 + $0x40] sm:$0xff] %v312
                  %v314 = vld [vmem:[%s294 + $0x90] sm:$0xff]
                  %315 = vst [vmem:[%s295 + $0x48] sm:$0xff] %v314
                  %v316 = vld [vmem:[%s294 + $0xa0] sm:$0xff]
                  %317 = vst [vmem:[%s295 + $0x50] sm:$0xff] %v316
                  %v318 = vld [vmem:[%s294 + $0xb0] sm:$0xff]
                  %319 = vst [vmem:[%s295 + $0x58] sm:$0xff] %v318
                  %v320 = vld [vmem:[%s294 + $0xc0] sm:$0xff]
                  %321 = vst [vmem:[%s295 + $0x60] sm:$0xff] %v320
                  %v322 = vld [vmem:[%s294 + $0xd0] sm:$0xff]
                  %323 = vst [vmem:[%s295 + $0x68] sm:$0xff] %v322
                  %v324 = vld [vmem:[%s294 + $0xe0] sm:$0xff]
                  %325 = vst [vmem:[%s295 + $0x70] sm:$0xff] %v324
                  %v326 = vld [vmem:[%s294 + $0xf0] sm:$0xff]
                  %327 = vst [vmem:[%s295 + $0x78] sm:$0xff] %v326
                  %v328 = vld [vmem:[%s294 + $0x100] sm:$0xff]
                  %329 = vst [vmem:[%s295 + $0x80] sm:$0xff] %v328
                  %v330 = vld [vmem:[%s294 + $0x110] sm:$0xff]
                  %331 = vst [vmem:[%s295 + $0x88] sm:$0xff] %v330
                  %v332 = vld [vmem:[%s294 + $0x120] sm:$0xff]
                  %333 = vst [vmem:[%s295 + $0x90] sm:$0xff] %v332
                  %v334 = vld [vmem:[%s294 + $0x130] sm:$0xff]
                  %335 = vst [vmem:[%s295 + $0x98] sm:$0xff] %v334
                  %v336 = vld [vmem:[%s294 + $0x140] sm:$0xff]
                  %337 = vst [vmem:[%s295 + $0xa0] sm:$0xff] %v336
                  %v338 = vld [vmem:[%s294 + $0x150] sm:$0xff]
                  %339 = vst [vmem:[%s295 + $0xa8] sm:$0xff] %v338
                  %v340 = vld [vmem:[%s294 + $0x160] sm:$0xff]
                  %341 = vst [vmem:[%s295 + $0xb0] sm:$0xff] %v340
                  %v342 = vld [vmem:[%s294 + $0x170] sm:$0xff]
                  %343 = vst [vmem:[%s295 + $0xb8] sm:$0xff] %v342
                  %v344 = vld [vmem:[%s294 + $0x180] sm:$0xff]
                  %345 = vst [vmem:[%s295 + $0xc0] sm:$0xff] %v344
                  %v346 = vld [vmem:[%s294 + $0x190] sm:$0xff]
                  %347 = vst [vmem:[%s295 + $0xc8] sm:$0xff] %v346
                  %v348 = vld [vmem:[%s294 + $0x1a0] sm:$0xff]
                  %349 = vst [vmem:[%s295 + $0xd0] sm:$0xff] %v348
                  %v350 = vld [vmem:[%s294 + $0x1b0] sm:$0xff]
                  %351 = vst [vmem:[%s295 + $0xd8] sm:$0xff] %v350
                  %v352 = vld [vmem:[%s294 + $0x1c0] sm:$0xff]
                  %353 = vst [vmem:[%s295 + $0xe0] sm:$0xff] %v352
                  %v354 = vld [vmem:[%s294 + $0x1d0] sm:$0xff]
                  %355 = vst [vmem:[%s295 + $0xe8] sm:$0xff] %v354
                  %v356 = vld [vmem:[%s294 + $0x1e0] sm:$0xff]
                  %357 = vst [vmem:[%s295 + $0xf0] sm:$0xff] %v356
                  %v358 = vld [vmem:[%s294 + $0x1f0] sm:$0xff]
                  %359 = vst [vmem:[%s295 + $0xf8] sm:$0xff] %v358
                $region60: #{gcn_forward.2} parent=54 // loop_footer
                  %s293 = sadd.s32 1, %s289
                $region61: #{gcn_forward.2} parent=54 // loop_footer_branch
                  %288 = sbr.rel target = $region57
                $region62: #{gcn_forward.2} parent=54 // loop_exit
                  _
              $region55: #{gcn_forward.2} parent=39 // pred_fallthru
                _
              // Predicated region
              $region63: #{gcn_forward.2} parent=39 // pred_check
                _
              $region64: #{gcn_forward.2} parent=39 // pred_check_branch
                %361 = sbr.rel target = $region66
              $region65: #{gcn_forward.2} parent=39 // pred_region
                _
              $region66: #{gcn_forward.2} parent=39 // pred_fallthru
                _
            $region40: #{gcn_forward.2} parent=35 // pred_fallthru
              _
            // Predicated region
            $region41: #{gcn_forward.2} parent=35 // pred_check
              _
            $region42: #{gcn_forward.2} parent=35 // pred_check_branch
              %212 = sbr.rel target = $region44
            $region43: #{gcn_forward.2} parent=35 // pred_region
              loop: start=0, step=1, limit=1
              $region45: #{gcn_forward.2} parent=43 // loop_pre_header
                _
              $region46: #{gcn_forward.2} parent=43 // loop_header
                %s215 = sphi 0, %s219
                %p216 = scmp.ge.s32.totalorder %s215, 1
                %s220 = sphi %s206, %s206
                %s221 = sphi %s200, %s200
              $region47: #{gcn_forward.2} parent=43 // loop_header_branch
                %218 = sbr.rel (%p216) target = $region51
              $region48: #{gcn_forward.2} parent=43 // loop_body
                %v222 = vld [vmem:[%s220] sm:$0xff]
                %223 = vst [vmem:[%s221] sm:$0xff] %v222
                %v224 = vld [vmem:[%s220 + $0x10] sm:$0xff]
                %225 = vst [vmem:[%s221 + $0x8] sm:$0xff] %v224
                %v226 = vld [vmem:[%s220 + $0x20] sm:$0xff]
                %227 = vst [vmem:[%s221 + $0x10] sm:$0xff] %v226
                %v228 = vld [vmem:[%s220 + $0x30] sm:$0xff]
                %229 = vst [vmem:[%s221 + $0x18] sm:$0xff] %v228
                %v230 = vld [vmem:[%s220 + $0x40] sm:$0xff]
                %231 = vst [vmem:[%s221 + $0x20] sm:$0xff] %v230
                %v232 = vld [vmem:[%s220 + $0x50] sm:$0xff]
                %233 = vst [vmem:[%s221 + $0x28] sm:$0xff] %v232
                %v234 = vld [vmem:[%s220 + $0x60] sm:$0xff]
                %235 = vst [vmem:[%s221 + $0x30] sm:$0xff] %v234
                %v236 = vld [vmem:[%s220 + $0x70] sm:$0xff]
                %237 = vst [vmem:[%s221 + $0x38] sm:$0xff] %v236
                %v238 = vld [vmem:[%s220 + $0x80] sm:$0xff]
                %239 = vst [vmem:[%s221 + $0x40] sm:$0xff] %v238
                %v240 = vld [vmem:[%s220 + $0x90] sm:$0xff]
                %241 = vst [vmem:[%s221 + $0x48] sm:$0xff] %v240
                %v242 = vld [vmem:[%s220 + $0xa0] sm:$0xff]
                %243 = vst [vmem:[%s221 + $0x50] sm:$0xff] %v242
                %v244 = vld [vmem:[%s220 + $0xb0] sm:$0xff]
                %245 = vst [vmem:[%s221 + $0x58] sm:$0xff] %v244
                %v246 = vld [vmem:[%s220 + $0xc0] sm:$0xff]
                %247 = vst [vmem:[%s221 + $0x60] sm:$0xff] %v246
                %v248 = vld [vmem:[%s220 + $0xd0] sm:$0xff]
                %249 = vst [vmem:[%s221 + $0x68] sm:$0xff] %v248
                %v250 = vld [vmem:[%s220 + $0xe0] sm:$0xff]
                %251 = vst [vmem:[%s221 + $0x70] sm:$0xff] %v250
                %v252 = vld [vmem:[%s220 + $0xf0] sm:$0xff]
                %253 = vst [vmem:[%s221 + $0x78] sm:$0xff] %v252
                %v254 = vld [vmem:[%s220 + $0x100] sm:$0xff]
                %255 = vst [vmem:[%s221 + $0x80] sm:$0xff] %v254
                %v256 = vld [vmem:[%s220 + $0x110] sm:$0xff]
                %257 = vst [vmem:[%s221 + $0x88] sm:$0xff] %v256
                %v258 = vld [vmem:[%s220 + $0x120] sm:$0xff]
                %259 = vst [vmem:[%s221 + $0x90] sm:$0xff] %v258
                %v260 = vld [vmem:[%s220 + $0x130] sm:$0xff]
                %261 = vst [vmem:[%s221 + $0x98] sm:$0xff] %v260
                %v262 = vld [vmem:[%s220 + $0x140] sm:$0xff]
                %263 = vst [vmem:[%s221 + $0xa0] sm:$0xff] %v262
                %v264 = vld [vmem:[%s220 + $0x150] sm:$0xff]
                %265 = vst [vmem:[%s221 + $0xa8] sm:$0xff] %v264
                %v266 = vld [vmem:[%s220 + $0x160] sm:$0xff]
                %267 = vst [vmem:[%s221 + $0xb0] sm:$0xff] %v266
                %v268 = vld [vmem:[%s220 + $0x170] sm:$0xff]
                %269 = vst [vmem:[%s221 + $0xb8] sm:$0xff] %v268
                %v270 = vld [vmem:[%s220 + $0x180] sm:$0xff]
                %271 = vst [vmem:[%s221 + $0xc0] sm:$0xff] %v270
                %v272 = vld [vmem:[%s220 + $0x190] sm:$0xff]
                %273 = vst [vmem:[%s221 + $0xc8] sm:$0xff] %v272
                %v274 = vld [vmem:[%s220 + $0x1a0] sm:$0xff]
                %275 = vst [vmem:[%s221 + $0xd0] sm:$0xff] %v274
                %v276 = vld [vmem:[%s220 + $0x1b0] sm:$0xff]
                %277 = vst [vmem:[%s221 + $0xd8] sm:$0xff] %v276
                %v278 = vld [vmem:[%s220 + $0x1c0] sm:$0xff]
                %279 = vst [vmem:[%s221 + $0xe0] sm:$0xff] %v278
                %v280 = vld [vmem:[%s220 + $0x1d0] sm:$0xff]
                %281 = vst [vmem:[%s221 + $0xe8] sm:$0xff] %v280
                %v282 = vld [vmem:[%s220 + $0x1e0] sm:$0xff]
                %283 = vst [vmem:[%s221 + $0xf0] sm:$0xff] %v282
                %v284 = vld [vmem:[%s220 + $0x1f0] sm:$0xff]
                %285 = vst [vmem:[%s221 + $0xf8] sm:$0xff] %v284
              $region49: #{gcn_forward.2} parent=43 // loop_footer
                %s219 = sadd.s32 1, %s215
              $region50: #{gcn_forward.2} parent=43 // loop_footer_branch
                %214 = sbr.rel target = $region46
              $region51: #{gcn_forward.2} parent=43 // loop_exit
                _
            $region44: #{gcn_forward.2} parent=35 // pred_fallthru
              _
          $region36: #{gcn_forward.2} parent=31 // pred_fallthru
            _
          %362 = vnop
        $region32: #{gcn_forward.2} parent=27 // pred_fallthru
          _
        // Predicated region
        $region67: #{gcn_forward.2} parent=27 // pred_check
          %p363 = pneg %p71
        $region68: #{gcn_forward.2} parent=27 // pred_check_branch
          %365 = sbr.rel (%p363) target = $region70
        $region69: #{gcn_forward.2} parent=27 // pred_region
          %s366 = smul.u32 32, %s19
          %p367 = scmp.lt.s32.totalorder %s366, 63
          %s368 = scalar_select %p367, %s366, 63
          %s369 = smul.addr %s368, 4
          %s370 = scalar_lea.vmem %s1, %s369
          %s371 = smul.u32 32, %s19
        $region70: #{gcn_forward.2} parent=27 // pred_fallthru
          _
      $region28: #{gcn_forward.2} parent=5 // pred_fallthru
        _
      %p372 = scmp.le.s32.totalorder 1, %s11
      %p373 = scmp.lt.s32.totalorder %s11, 5
      %p374 = pnand %p372, %p373
      %p375 = pneg %p374
      // Predicated region
      $region71: #{gcn_forward.2} parent=5 // pred_check
        _
      $region72: #{gcn_forward.2} parent=5 // pred_check_branch
        %377 = sbr.rel (%p374) target = $region74
      $region73: #{gcn_forward.2} parent=5 // pred_region
        %s378 = ssub.s32 %s11, 1
        %s379 = sand.u32 %s38, 1
        %s380 = sand.u32 %s38, 1
        %s381 = smul.addr %s380, 256
        %s382 = scalar_lea.vmem [#allocation3], %s381
        // Predicated region
        $region75: #{gcn_forward.2} parent=73 // pred_check
          %p383 = pneg %p51
        $region76: #{gcn_forward.2} parent=73 // pred_check_branch
          %385 = sbr.rel (%p383) target = $region78
        $region77: #{gcn_forward.2} parent=73 // pred_region
          _
        $region78: #{gcn_forward.2} parent=73 // pred_fallthru
          _
        %s386 = sand.u32 %s38, 1
        %s387 = sand.u32 %s38, 1
        %s388 = smul.addr %s387, 256
        %s389 = scalar_lea.vmem [#allocation3], %s388
        %p390 = pneg %p51
        %p391 = pneg %p48
        %s392 = smul.u32 32, %s21
        %p393 = scmp.lt.s32.totalorder %s392, 63
        %s394 = scalar_select %p393, %s392, 63
        %s395 = smul.addr %s394, 4
        %s396 = scalar_lea.vmem %s1, %s395
        %p397 = pneg %p77
        %p398 = pneg %p74
        %p399 = pneg %p98
        %p400 = pneg %p95
        %p401 = pneg %p119
        %p402 = pneg %p116
        %p403 = pneg %p140
        %p404 = pneg %p137
        %p405 = pneg %p166
        %p406 = pneg %p163
        %s407 = smul.u32 32, %s20
        %p408 = scmp.lt.s32.totalorder %s407, 63
        %s409 = scalar_select %p408, %s407, 63
        %s410 = smul.addr %s409, 8
        %s411 = scalar_lea.vmem %s5, %s410
        %s412 = smul.u32 32, %s20
        %s413 = smul.u32 2, %s21
        %s414 = smul.u32 32, %s21
        %p415 = scmp.lt.s32.totalorder %s414, 63
        %s416 = scalar_select %p415, %s414, 63
        %s417 = smul.addr %s416, 4
        %s418 = scalar_lea.vmem %s1, %s417
        %s419 = smul.u32 32, %s21
        %s420 = smul.u32 32, %s20
        %p421 = scmp.lt.s32.totalorder %s420, 63
        %s422 = scalar_select %p421, %s420, 63
        %s423 = smul.addr %s422, 8
        %s424 = scalar_lea.vmem %s5, %s423
        %s425 = smul.u32 32, %s20
        %p427 = scmp.eq.s32.totalorder %s21, 0
        // Predicated region
        $region79: #{gcn_forward.2} parent=73 // pred_check
          %p428 = pneg %p427
        $region80: #{gcn_forward.2} parent=73 // pred_check_branch
          %430 = sbr.rel (%p428) target = $region82
        $region81: #{gcn_forward.2} parent=73 // pred_region
          %vm431 = vcmask 130048
          %432 = vst.msk [vmem:[#allocation2] sm:$0xff] %vm431, 0.0
          %433 = vst.msk [vmem:[#allocation2 + $0x8] sm:$0xff] %vm431, 0.0
          %434 = vst.msk [vmem:[#allocation2 + $0x10] sm:$0xff] %vm431, 0.0
          %435 = vst.msk [vmem:[#allocation2 + $0x18] sm:$0xff] %vm431, 0.0
          %436 = vst.msk [vmem:[#allocation2 + $0x20] sm:$0xff] %vm431, 0.0
          %437 = vst.msk [vmem:[#allocation2 + $0x28] sm:$0xff] %vm431, 0.0
          %438 = vst.msk [vmem:[#allocation2 + $0x30] sm:$0xff] %vm431, 0.0
          %439 = vst.msk [vmem:[#allocation2 + $0x38] sm:$0xff] %vm431, 0.0
          %440 = vst.msk [vmem:[#allocation2 + $0x40] sm:$0xff] %vm431, 0.0
          %441 = vst.msk [vmem:[#allocation2 + $0x48] sm:$0xff] %vm431, 0.0
          %442 = vst.msk [vmem:[#allocation2 + $0x50] sm:$0xff] %vm431, 0.0
          %443 = vst.msk [vmem:[#allocation2 + $0x58] sm:$0xff] %vm431, 0.0
          %444 = vst.msk [vmem:[#allocation2 + $0x60] sm:$0xff] %vm431, 0.0
          %445 = vst.msk [vmem:[#allocation2 + $0x68] sm:$0xff] %vm431, 0.0
          %446 = vst.msk [vmem:[#allocation2 + $0x70] sm:$0xff] %vm431, 0.0
          %447 = vst.msk [vmem:[#allocation2 + $0x78] sm:$0xff] %vm431, 0.0
          %448 = vst.msk [vmem:[#allocation2 + $0x80] sm:$0xff] %vm431, 0.0
          %449 = vst.msk [vmem:[#allocation2 + $0x88] sm:$0xff] %vm431, 0.0
          %450 = vst.msk [vmem:[#allocation2 + $0x90] sm:$0xff] %vm431, 0.0
          %451 = vst.msk [vmem:[#allocation2 + $0x98] sm:$0xff] %vm431, 0.0
          %452 = vst.msk [vmem:[#allocation2 + $0xa0] sm:$0xff] %vm431, 0.0
          %453 = vst.msk [vmem:[#allocation2 + $0xa8] sm:$0xff] %vm431, 0.0
          %454 = vst.msk [vmem:[#allocation2 + $0xb0] sm:$0xff] %vm431, 0.0
          %455 = vst.msk [vmem:[#allocation2 + $0xb8] sm:$0xff] %vm431, 0.0
          %456 = vst.msk [vmem:[#allocation2 + $0xc0] sm:$0xff] %vm431, 0.0
          %457 = vst.msk [vmem:[#allocation2 + $0xc8] sm:$0xff] %vm431, 0.0
          %458 = vst.msk [vmem:[#allocation2 + $0xd0] sm:$0xff] %vm431, 0.0
          %459 = vst.msk [vmem:[#allocation2 + $0xd8] sm:$0xff] %vm431, 0.0
          %460 = vst.msk [vmem:[#allocation2 + $0xe0] sm:$0xff] %vm431, 0.0
          %461 = vst.msk [vmem:[#allocation2 + $0xe8] sm:$0xff] %vm431, 0.0
          %462 = vst.msk [vmem:[#allocation2 + $0xf0] sm:$0xff] %vm431, 0.0
          %463 = vst.msk [vmem:[#allocation2 + $0xf8] sm:$0xff] %vm431, 0.0
        $region82: #{gcn_forward.2} parent=73 // pred_fallthru
          _
        %v464 = vld [vmem:[%s418] sm:$0xf]
        %v465 = vld [vmem:[%s418 + $0x4] sm:$0xf]
        %v466 = vld [vmem:[%s418 + $0x8] sm:$0xf]
        %v467 = vld [vmem:[%s418 + $0xc] sm:$0xf]
        %v468 = vld [vmem:[%s418 + $0x10] sm:$0xf]
        %v469 = vld [vmem:[%s418 + $0x14] sm:$0xf]
        %v470 = vld [vmem:[%s418 + $0x18] sm:$0xf]
        %v471 = vld [vmem:[%s418 + $0x1c] sm:$0xf]
        %v472 = vld [vmem:[%s418 + $0x20] sm:$0xf]
        %v473 = vld [vmem:[%s418 + $0x24] sm:$0xf]
        %v474 = vld [vmem:[%s418 + $0x28] sm:$0xf]
        %v475 = vld [vmem:[%s418 + $0x2c] sm:$0xf]
        %v476 = vld [vmem:[%s418 + $0x30] sm:$0xf]
        %v477 = vld [vmem:[%s418 + $0x34] sm:$0xf]
        %v478 = vld [vmem:[%s418 + $0x38] sm:$0xf]
        %v479 = vld [vmem:[%s418 + $0x3c] sm:$0xf]
        %v480 = vld [vmem:[%s418 + $0x40] sm:$0xf]
        %v481 = vld [vmem:[%s418 + $0x44] sm:$0xf]
        %v482 = vld [vmem:[%s418 + $0x48] sm:$0xf]
        %v483 = vld [vmem:[%s418 + $0x4c] sm:$0xf]
        %v484 = vld [vmem:[%s418 + $0x50] sm:$0xf]
        %v485 = vld [vmem:[%s418 + $0x54] sm:$0xf]
        %v486 = vld [vmem:[%s418 + $0x58] sm:$0xf]
        %v487 = vld [vmem:[%s418 + $0x5c] sm:$0xf]
        %v488 = vld [vmem:[%s418 + $0x60] sm:$0xf]
        %v489 = vld [vmem:[%s418 + $0x64] sm:$0xf]
        %v490 = vld [vmem:[%s418 + $0x68] sm:$0xf]
        %v491 = vld [vmem:[%s418 + $0x6c] sm:$0xf]
        %v492 = vld [vmem:[%s418 + $0x70] sm:$0xf]
        %v493 = vld [vmem:[%s418 + $0x74] sm:$0xf]
        %v494 = vld [vmem:[%s418 + $0x78] sm:$0xf]
        %v495 = vld [vmem:[%s418 + $0x7c] sm:$0xf]
        %v496 = vunpack.c.l.bf16 %v464
        %v497 = vunpack.c.l.bf16 %v465
        %v498 = vunpack.c.l.bf16 %v466
        %v499 = vunpack.c.l.bf16 %v467
        %v500 = vunpack.c.l.bf16 %v468
        %v501 = vunpack.c.l.bf16 %v469
        %v502 = vunpack.c.l.bf16 %v470
        %v503 = vunpack.c.l.bf16 %v471
        %v504 = vunpack.c.l.bf16 %v472
        %v505 = vunpack.c.l.bf16 %v473
        %v506 = vunpack.c.l.bf16 %v474
        %v507 = vunpack.c.l.bf16 %v475
        %v508 = vunpack.c.l.bf16 %v476
        %v509 = vunpack.c.l.bf16 %v477
        %v510 = vunpack.c.l.bf16 %v478
        %v511 = vunpack.c.l.bf16 %v479
        %v512 = vunpack.c.l.bf16 %v480
        %v513 = vunpack.c.l.bf16 %v481
        %v514 = vunpack.c.l.bf16 %v482
        %v515 = vunpack.c.l.bf16 %v483
        %v516 = vunpack.c.l.bf16 %v484
        %v517 = vunpack.c.l.bf16 %v485
        %v518 = vunpack.c.l.bf16 %v486
        %v519 = vunpack.c.l.bf16 %v487
        %v520 = vunpack.c.l.bf16 %v488
        %v521 = vunpack.c.l.bf16 %v489
        %v522 = vunpack.c.l.bf16 %v490
        %v523 = vunpack.c.l.bf16 %v491
        %v524 = vunpack.c.l.bf16 %v492
        %v525 = vunpack.c.l.bf16 %v493
        %v526 = vunpack.c.l.bf16 %v494
        %v527 = vunpack.c.l.bf16 %v495
        %v528 = vld [vmem:[%s2] sm:$0x1]
        %530 = vset.pattern.permute.xlu0 0
        %531 = vperm.xlu0 %530, %v496
        %v532 = vpop.permute.xlu0 %531
        %535 = vset.pattern.permute.xlu0 0
        %536 = vperm.xlu0 %535, %v497
        %v537 = vpop.permute.xlu0 %536
        %540 = vset.pattern.permute.xlu0 0
        %541 = vperm.xlu0 %540, %v498
        %v542 = vpop.permute.xlu0 %541
        %545 = vset.pattern.permute.xlu0 0
        %546 = vperm.xlu0 %545, %v499
        %v547 = vpop.permute.xlu0 %546
        %550 = vset.pattern.permute.xlu0 0
        %551 = vperm.xlu0 %550, %v500
        %v552 = vpop.permute.xlu0 %551
        %555 = vset.pattern.permute.xlu0 0
        %556 = vperm.xlu0 %555, %v501
        %v557 = vpop.permute.xlu0 %556
        %560 = vset.pattern.permute.xlu0 0
        %561 = vperm.xlu0 %560, %v502
        %v562 = vpop.permute.xlu0 %561
        %565 = vset.pattern.permute.xlu0 0
        %566 = vperm.xlu0 %565, %v503
        %v567 = vpop.permute.xlu0 %566
        %570 = vset.pattern.permute.xlu0 0
        %571 = vperm.xlu0 %570, %v504
        %v572 = vpop.permute.xlu0 %571
        %575 = vset.pattern.permute.xlu0 0
        %576 = vperm.xlu0 %575, %v505
        %v577 = vpop.permute.xlu0 %576
        %580 = vset.pattern.permute.xlu0 0
        %581 = vperm.xlu0 %580, %v506
        %v582 = vpop.permute.xlu0 %581
        %585 = vset.pattern.permute.xlu0 0
        %586 = vperm.xlu0 %585, %v507
        %v587 = vpop.permute.xlu0 %586
        %590 = vset.pattern.permute.xlu0 0
        %591 = vperm.xlu0 %590, %v508
        %v592 = vpop.permute.xlu0 %591
        %595 = vset.pattern.permute.xlu0 0
        %596 = vperm.xlu0 %595, %v509
        %v597 = vpop.permute.xlu0 %596
        %600 = vset.pattern.permute.xlu0 0
        %601 = vperm.xlu0 %600, %v510
        %v602 = vpop.permute.xlu0 %601
        %605 = vset.pattern.permute.xlu0 0
        %606 = vperm.xlu0 %605, %v511
        %v607 = vpop.permute.xlu0 %606
        %610 = vset.pattern.permute.xlu0 0
        %611 = vperm.xlu0 %610, %v512
        %v612 = vpop.permute.xlu0 %611
        %615 = vset.pattern.permute.xlu0 0
        %616 = vperm.xlu0 %615, %v513
        %v617 = vpop.permute.xlu0 %616
        %620 = vset.pattern.permute.xlu0 0
        %621 = vperm.xlu0 %620, %v514
        %v622 = vpop.permute.xlu0 %621
        %625 = vset.pattern.permute.xlu0 0
        %626 = vperm.xlu0 %625, %v515
        %v627 = vpop.permute.xlu0 %626
        %630 = vset.pattern.permute.xlu0 0
        %631 = vperm.xlu0 %630, %v516
        %v632 = vpop.permute.xlu0 %631
        %635 = vset.pattern.permute.xlu0 0
        %636 = vperm.xlu0 %635, %v517
        %v637 = vpop.permute.xlu0 %636
        %640 = vset.pattern.permute.xlu0 0
        %641 = vperm.xlu0 %640, %v518
        %v642 = vpop.permute.xlu0 %641
        %645 = vset.pattern.permute.xlu0 0
        %646 = vperm.xlu0 %645, %v519
        %v647 = vpop.permute.xlu0 %646
        %650 = vset.pattern.permute.xlu0 0
        %651 = vperm.xlu0 %650, %v520
        %v652 = vpop.permute.xlu0 %651
        %655 = vset.pattern.permute.xlu0 0
        %656 = vperm.xlu0 %655, %v521
        %v657 = vpop.permute.xlu0 %656
        %660 = vset.pattern.permute.xlu0 0
        %661 = vperm.xlu0 %660, %v522
        %v662 = vpop.permute.xlu0 %661
        %665 = vset.pattern.permute.xlu0 0
        %666 = vperm.xlu0 %665, %v523
        %v667 = vpop.permute.xlu0 %666
        %670 = vset.pattern.permute.xlu0 0
        %671 = vperm.xlu0 %670, %v524
        %v672 = vpop.permute.xlu0 %671
        %675 = vset.pattern.permute.xlu0 0
        %676 = vperm.xlu0 %675, %v525
        %v677 = vpop.permute.xlu0 %676
        %680 = vset.pattern.permute.xlu0 0
        %681 = vperm.xlu0 %680, %v526
        %v682 = vpop.permute.xlu0 %681
        %685 = vset.pattern.permute.xlu0 0
        %686 = vperm.xlu0 %685, %v527
        %v687 = vpop.permute.xlu0 %686
        %v690 = vlaneseq
        %v691 = vshrl.u32 %v690, 7
        %v692 = vsub.s32 0, %v691
        %v693 = vrot.slane %v528, %v692
        %v695 = vmul.f32 %v532, %v693
        %v696 = vmul.f32 %v537, %v693
        %v697 = vmul.f32 %v542, %v693
        %v698 = vmul.f32 %v547, %v693
        %v699 = vmul.f32 %v552, %v693
        %v700 = vmul.f32 %v557, %v693
        %v701 = vmul.f32 %v562, %v693
        %v702 = vmul.f32 %v567, %v693
        %v703 = vmul.f32 %v572, %v693
        %v704 = vmul.f32 %v577, %v693
        %v705 = vmul.f32 %v582, %v693
        %v706 = vmul.f32 %v587, %v693
        %v707 = vmul.f32 %v592, %v693
        %v708 = vmul.f32 %v597, %v693
        %v709 = vmul.f32 %v602, %v693
        %v710 = vmul.f32 %v607, %v693
        %v711 = vmul.f32 %v612, %v693
        %v712 = vmul.f32 %v617, %v693
        %v713 = vmul.f32 %v622, %v693
        %v714 = vmul.f32 %v627, %v693
        %v715 = vmul.f32 %v632, %v693
        %v716 = vmul.f32 %v637, %v693
        %v717 = vmul.f32 %v642, %v693
        %v718 = vmul.f32 %v647, %v693
        %v719 = vmul.f32 %v652, %v693
        %v720 = vmul.f32 %v657, %v693
        %v721 = vmul.f32 %v662, %v693
        %v722 = vmul.f32 %v667, %v693
        %v723 = vmul.f32 %v672, %v693
        %v724 = vmul.f32 %v677, %v693
        %v725 = vmul.f32 %v682, %v693
        %v726 = vmul.f32 %v687, %v693
        %v727 = vpack.c.bf16 %v696, %v695
        %v728 = vpack.c.bf16 %v698, %v697
        %v729 = vpack.c.bf16 %v700, %v699
        %v730 = vpack.c.bf16 %v702, %v701
        %v731 = vpack.c.bf16 %v704, %v703
        %v732 = vpack.c.bf16 %v706, %v705
        %v733 = vpack.c.bf16 %v708, %v707
        %v734 = vpack.c.bf16 %v710, %v709
        %v735 = vpack.c.bf16 %v712, %v711
        %v736 = vpack.c.bf16 %v714, %v713
        %v737 = vpack.c.bf16 %v716, %v715
        %v738 = vpack.c.bf16 %v718, %v717
        %v739 = vpack.c.bf16 %v720, %v719
        %v740 = vpack.c.bf16 %v722, %v721
        %v741 = vpack.c.bf16 %v724, %v723
        %v742 = vpack.c.bf16 %v726, %v725
        %v743 = vld [vmem:[#allocation2] sm:$0xff]
        %v744 = vld [vmem:[#allocation2 + $0x8] sm:$0xff]
        %v745 = vld [vmem:[#allocation2 + $0x10] sm:$0xff]
        %v746 = vld [vmem:[#allocation2 + $0x18] sm:$0xff]
        %v747 = vld [vmem:[#allocation2 + $0x20] sm:$0xff]
        %v748 = vld [vmem:[#allocation2 + $0x28] sm:$0xff]
        %v749 = vld [vmem:[#allocation2 + $0x30] sm:$0xff]
        %v750 = vld [vmem:[#allocation2 + $0x38] sm:$0xff]
        %v751 = vld [vmem:[#allocation2 + $0x40] sm:$0xff]
        %v752 = vld [vmem:[#allocation2 + $0x48] sm:$0xff]
        %v753 = vld [vmem:[#allocation2 + $0x50] sm:$0xff]
        %v754 = vld [vmem:[#allocation2 + $0x58] sm:$0xff]
        %v755 = vld [vmem:[#allocation2 + $0x60] sm:$0xff]
        %v756 = vld [vmem:[#allocation2 + $0x68] sm:$0xff]
        %v757 = vld [vmem:[#allocation2 + $0x70] sm:$0xff]
        %v758 = vld [vmem:[#allocation2 + $0x78] sm:$0xff]
        %v759 = vld [vmem:[#allocation2 + $0x80] sm:$0xff]
        %v760 = vld [vmem:[#allocation2 + $0x88] sm:$0xff]
        %v761 = vld [vmem:[#allocation2 + $0x90] sm:$0xff]
        %v762 = vld [vmem:[#allocation2 + $0x98] sm:$0xff]
        %v763 = vld [vmem:[#allocation2 + $0xa0] sm:$0xff]
        %v764 = vld [vmem:[#allocation2 + $0xa8] sm:$0xff]
        %v765 = vld [vmem:[#allocation2 + $0xb0] sm:$0xff]
        %v766 = vld [vmem:[#allocation2 + $0xb8] sm:$0xff]
        %v767 = vld [vmem:[#allocation2 + $0xc0] sm:$0xff]
        %v768 = vld [vmem:[#allocation2 + $0xc8] sm:$0xff]
        %v769 = vld [vmem:[#allocation2 + $0xd0] sm:$0xff]
        %v770 = vld [vmem:[#allocation2 + $0xd8] sm:$0xff]
        %v771 = vld [vmem:[#allocation2 + $0xe0] sm:$0xff]
        %v772 = vld [vmem:[#allocation2 + $0xe8] sm:$0xff]
        %v773 = vld [vmem:[#allocation2 + $0xf0] sm:$0xff]
        %v774 = vld [vmem:[#allocation2 + $0xf8] sm:$0xff]
        %v775 = vld [vmem:[%s382] sm:$0xff]
        %v776 = vld [vmem:[%s382 + $0x8] sm:$0xff]
        %v777 = vld [vmem:[%s382 + $0x10] sm:$0xff]
        %v778 = vld [vmem:[%s382 + $0x18] sm:$0xff]
        %v779 = vld [vmem:[%s382 + $0x20] sm:$0xff]
        %v780 = vld [vmem:[%s382 + $0x28] sm:$0xff]
        %v781 = vld [vmem:[%s382 + $0x30] sm:$0xff]
        %v782 = vld [vmem:[%s382 + $0x38] sm:$0xff]
        %v783 = vld [vmem:[%s382 + $0x40] sm:$0xff]
        %v784 = vld [vmem:[%s382 + $0x48] sm:$0xff]
        %v785 = vld [vmem:[%s382 + $0x50] sm:$0xff]
        %v786 = vld [vmem:[%s382 + $0x58] sm:$0xff]
        %v787 = vld [vmem:[%s382 + $0x60] sm:$0xff]
        %v788 = vld [vmem:[%s382 + $0x68] sm:$0xff]
        %v789 = vld [vmem:[%s382 + $0x70] sm:$0xff]
        %v790 = vld [vmem:[%s382 + $0x78] sm:$0xff]
        %v791 = vld [vmem:[%s382 + $0x80] sm:$0xff]
        %v792 = vld [vmem:[%s382 + $0x88] sm:$0xff]
        %v793 = vld [vmem:[%s382 + $0x90] sm:$0xff]
        %v794 = vld [vmem:[%s382 + $0x98] sm:$0xff]
        %v795 = vld [vmem:[%s382 + $0xa0] sm:$0xff]
        %v796 = vld [vmem:[%s382 + $0xa8] sm:$0xff]
        %v797 = vld [vmem:[%s382 + $0xb0] sm:$0xff]
        %v798 = vld [vmem:[%s382 + $0xb8] sm:$0xff]
        %v799 = vld [vmem:[%s382 + $0xc0] sm:$0xff]
        %v800 = vld [vmem:[%s382 + $0xc8] sm:$0xff]
        %v801 = vld [vmem:[%s382 + $0xd0] sm:$0xff]
        %v802 = vld [vmem:[%s382 + $0xd8] sm:$0xff]
        %v803 = vld [vmem:[%s382 + $0xe0] sm:$0xff]
        %v804 = vld [vmem:[%s382 + $0xe8] sm:$0xff]
        %v805 = vld [vmem:[%s382 + $0xf0] sm:$0xff]
        %v806 = vld [vmem:[%s382 + $0xf8] sm:$0xff]
        %v839 = vunpack.c.l.b16 %v775
        %v840 = vunpack.c.h.b16 %v775
        %v841 = vunpack.c.l.b16 %v776
        %v842 = vunpack.c.h.b16 %v776
        %v843 = vunpack.c.l.b16 %v777
        %v844 = vunpack.c.h.b16 %v777
        %v845 = vunpack.c.l.b16 %v778
        %v846 = vunpack.c.h.b16 %v778
        %v847 = vunpack.c.l.b16 %v779
        %v848 = vunpack.c.h.b16 %v779
        %v849 = vunpack.c.l.b16 %v780
        %v850 = vunpack.c.h.b16 %v780
        %v851 = vunpack.c.l.b16 %v781
        %v852 = vunpack.c.h.b16 %v781
        %v853 = vunpack.c.l.b16 %v782
        %v854 = vunpack.c.h.b16 %v782
        %v855 = vunpack.c.l.b16 %v783
        %v856 = vunpack.c.h.b16 %v783
        %v857 = vunpack.c.l.b16 %v784
        %v858 = vunpack.c.h.b16 %v784
        %v859 = vunpack.c.l.b16 %v785
        %v860 = vunpack.c.h.b16 %v785
        %v861 = vunpack.c.l.b16 %v786
        %v862 = vunpack.c.h.b16 %v786
        %v863 = vunpack.c.l.b16 %v787
        %v864 = vunpack.c.h.b16 %v787
        %v865 = vunpack.c.l.b16 %v788
        %v866 = vunpack.c.h.b16 %v788
        %v867 = vunpack.c.l.b16 %v789
        %v868 = vunpack.c.h.b16 %v789
        %v869 = vunpack.c.l.b16 %v790
        %v870 = vunpack.c.h.b16 %v790
        %v871 = vunpack.c.l.b16 %v791
        %v872 = vunpack.c.h.b16 %v791
        %v873 = vunpack.c.l.b16 %v792
        %v874 = vunpack.c.h.b16 %v792
        %v875 = vunpack.c.l.b16 %v793
        %v876 = vunpack.c.h.b16 %v793
        %v877 = vunpack.c.l.b16 %v794
        %v878 = vunpack.c.h.b16 %v794
        %v879 = vunpack.c.l.b16 %v795
        %v880 = vunpack.c.h.b16 %v795
        %v881 = vunpack.c.l.b16 %v796
        %v882 = vunpack.c.h.b16 %v796
        %v883 = vunpack.c.l.b16 %v797
        %v884 = vunpack.c.h.b16 %v797
        %v885 = vunpack.c.l.b16 %v798
        %v886 = vunpack.c.h.b16 %v798
        %v887 = vunpack.c.l.b16 %v799
        %v888 = vunpack.c.h.b16 %v799
        %v889 = vunpack.c.l.b16 %v800
        %v890 = vunpack.c.h.b16 %v800
        %v891 = vunpack.c.l.b16 %v801
        %v892 = vunpack.c.h.b16 %v801
        %v893 = vunpack.c.l.b16 %v802
        %v894 = vunpack.c.h.b16 %v802
        %v895 = vunpack.c.l.b16 %v803
        %v896 = vunpack.c.h.b16 %v803
        %v897 = vunpack.c.l.b16 %v804
        %v898 = vunpack.c.h.b16 %v804
        %v899 = vunpack.c.l.b16 %v805
        %v900 = vunpack.c.h.b16 %v805
        %v901 = vunpack.c.l.b16 %v806
        %v902 = vunpack.c.h.b16 %v806
        %v903 = vpack.c.b16 %v841, %v839
        %v904 = vpack.c.b16 %v842, %v840
        %v905 = vpack.c.b16 %v845, %v843
        %v906 = vpack.c.b16 %v846, %v844
        %v907 = vpack.c.b16 %v849, %v847
        %v908 = vpack.c.b16 %v850, %v848
        %v909 = vpack.c.b16 %v853, %v851
        %v910 = vpack.c.b16 %v854, %v852
        %v911 = vpack.c.b16 %v857, %v855
        %v912 = vpack.c.b16 %v858, %v856
        %v913 = vpack.c.b16 %v861, %v859
        %v914 = vpack.c.b16 %v862, %v860
        %v915 = vpack.c.b16 %v865, %v863
        %v916 = vpack.c.b16 %v866, %v864
        %v917 = vpack.c.b16 %v869, %v867
        %v918 = vpack.c.b16 %v870, %v868
        %v919 = vpack.c.b16 %v873, %v871
        %v920 = vpack.c.b16 %v874, %v872
        %v921 = vpack.c.b16 %v877, %v875
        %v922 = vpack.c.b16 %v878, %v876
        %v923 = vpack.c.b16 %v881, %v879
        %v924 = vpack.c.b16 %v882, %v880
        %v925 = vpack.c.b16 %v885, %v883
        %v926 = vpack.c.b16 %v886, %v884
        %v927 = vpack.c.b16 %v889, %v887
        %v928 = vpack.c.b16 %v890, %v888
        %v929 = vpack.c.b16 %v893, %v891
        %v930 = vpack.c.b16 %v894, %v892
        %v931 = vpack.c.b16 %v897, %v895
        %v932 = vpack.c.b16 %v898, %v896
        %v933 = vpack.c.b16 %v901, %v899
        %v934 = vpack.c.b16 %v902, %v900
        %967 = vmatprep.subr.bf16.mxu0 0
        %968 = vmatpush1.bf16.msra.mxu0 %v727
        %969 = vmatprep.subr.bf16.mxu0 0
        %970 = vmatpush1.bf16.msra.mxu0 %v728
        %971 = vmatprep.subr.bf16.mxu0 0
        %972 = vmatpush1.bf16.msra.mxu0 %v729
        %973 = vmatprep.subr.bf16.mxu0 0
        %974 = vmatpush1.bf16.msra.mxu0 %v730
        %975 = vmatprep.subr.bf16.mxu0 0
        %976 = vmatpush1.bf16.msra.mxu0 %v731
        %977 = vmatprep.subr.bf16.mxu0 0
        %978 = vmatpush1.bf16.msra.mxu0 %v732
        %979 = vmatprep.subr.bf16.mxu0 0
        %980 = vmatpush1.bf16.msra.mxu0 %v733
        %981 = vmatprep.subr.bf16.mxu0 0
        %982 = vmatpush1.bf16.msra.mxu0 %v734
        %983 = vmatprep.subr.bf16.mxu0 0
        %984 = vmatpush1.bf16.msra.mxu0 %v735
        %985 = vmatprep.subr.bf16.mxu0 0
        %986 = vmatpush1.bf16.msra.mxu0 %v736
        %987 = vmatprep.subr.bf16.mxu0 0
        %988 = vmatpush1.bf16.msra.mxu0 %v737
        %989 = vmatprep.subr.bf16.mxu0 0
        %990 = vmatpush1.bf16.msra.mxu0 %v738
        %991 = vmatprep.subr.bf16.mxu0 0
        %992 = vmatpush1.bf16.msra.mxu0 %v739
        %993 = vmatprep.subr.bf16.mxu0 0
        %994 = vmatpush1.bf16.msra.mxu0 %v740
        %995 = vmatprep.subr.bf16.mxu0 0
        %996 = vmatpush1.bf16.msra.mxu0 %v741
        %997 = vmatprep.subr.bf16.mxu0 0
        %998 = vmatpush1.bf16.msra.mxu0 %v742
        %999 = vmatprep.mubr.bf16.mxu0 %v904
        %1000 = vmatmul.mubr.bf16.gmra.mrb[0].mxu0 %v903
        %v1001 = vpop.f32.mrb[0].mxu0
        %v1002 = vadd.f32 0.0, %v1001
        %v1003 = vpop.f32.mrb[0].mxu0
        %v1004 = vpop.f32.mrb[0].mxu0
        %v1005 = vadd.f32 0.0, %v1004
        %v1006 = vpop.f32.mrb[0].mxu0
        %1007 = vmatprep.mubr.bf16.mxu0 %v906
        %1008 = vmatmul.mubr.bf16.gmra.mrb[0].mxu0 %v905
        %v1009 = vpop.f32.mrb[0].mxu0
        %v1010 = vadd.f32 0.0, %v1009
        %v1011 = vpop.f32.mrb[0].mxu0
        %v1012 = vpop.f32.mrb[0].mxu0
        %v1013 = vadd.f32 0.0, %v1012
        %v1014 = vpop.f32.mrb[0].mxu0
        %1015 = vmatprep.mubr.bf16.mxu0 %v908
        %1016 = vmatmul.mubr.bf16.gmra.mrb[0].mxu0 %v907
        %v1017 = vpop.f32.mrb[0].mxu0
        %v1018 = vadd.f32 0.0, %v1017
        %v1019 = vpop.f32.mrb[0].mxu0
        %v1020 = vpop.f32.mrb[0].mxu0
        %v1021 = vadd.f32 0.0, %v1020
        %v1022 = vpop.f32.mrb[0].mxu0
        %1023 = vmatprep.mubr.bf16.mxu0 %v910
        %1024 = vmatmul.mubr.bf16.gmra.mrb[0].mxu0 %v909
        %v1025 = vpop.f32.mrb[0].mxu0
        %v1026 = vadd.f32 0.0, %v1025
        %v1027 = vpop.f32.mrb[0].mxu0
        %v1028 = vpop.f32.mrb[0].mxu0
        %v1029 = vadd.f32 0.0, %v1028
        %v1030 = vpop.f32.mrb[0].mxu0
        %1031 = vmatprep.mubr.bf16.mxu0 %v912
        %1032 = vmatmul.mubr.bf16.gmra.mrb[0].mxu0 %v911
        %v1033 = vpop.f32.mrb[0].mxu0
        %v1034 = vadd.f32 0.0, %v1033
        %v1035 = vpop.f32.mrb[0].mxu0
        %v1036 = vpop.f32.mrb[0].mxu0
        %v1037 = vadd.f32 0.0, %v1036
        %v1038 = vpop.f32.mrb[0].mxu0
        %1039 = vmatprep.mubr.bf16.mxu0 %v914
        %1040 = vmatmul.mubr.bf16.gmra.mrb[0].mxu0 %v913
        %v1041 = vpop.f32.mrb[0].mxu0
        %v1042 = vadd.f32 0.0, %v1041
        %v1043 = vpop.f32.mrb[0].mxu0
        %v1044 = vpop.f32.mrb[0].mxu0
        %v1045 = vadd.f32 0.0, %v1044
        %v1046 = vpop.f32.mrb[0].mxu0
        %1047 = vmatprep.mubr.bf16.mxu0 %v916
        %1048 = vmatmul.mubr.bf16.gmra.mrb[0].mxu0 %v915
        %v1049 = vpop.f32.mrb[0].mxu0
        %v1050 = vadd.f32 0.0, %v1049
        %v1051 = vpop.f32.mrb[0].mxu0
        %v1052 = vpop.f32.mrb[0].mxu0
        %v1053 = vadd.f32 0.0, %v1052
        %v1054 = vpop.f32.mrb[0].mxu0
        %1055 = vmatprep.mubr.bf16.mxu0 %v918
        %1056 = vmatmul.mubr.bf16.gmra.mrb[0].mxu0 %v917
        %v1057 = vpop.f32.mrb[0].mxu0
        %v1058 = vadd.f32 0.0, %v1057
        %v1059 = vpop.f32.mrb[0].mxu0
        %v1060 = vpop.f32.mrb[0].mxu0
        %v1061 = vadd.f32 0.0, %v1060
        %v1062 = vpop.f32.mrb[0].mxu0
        %1063 = vmatprep.mubr.bf16.mxu0 %v920
        %1064 = vmatmul.mubr.bf16.gmra.mrb[0].mxu0 %v919
        %v1065 = vpop.f32.mrb[0].mxu0
        %v1066 = vadd.f32 0.0, %v1065
        %v1067 = vpop.f32.mrb[0].mxu0
        %v1068 = vpop.f32.mrb[0].mxu0
        %v1069 = vadd.f32 0.0, %v1068
        %v1070 = vpop.f32.mrb[0].mxu0
        %1071 = vmatprep.mubr.bf16.mxu0 %v922
        %1072 = vmatmul.mubr.bf16.gmra.mrb[0].mxu0 %v921
        %v1073 = vpop.f32.mrb[0].mxu0
        %v1074 = vadd.f32 0.0, %v1073
        %v1075 = vpop.f32.mrb[0].mxu0
        %v1076 = vpop.f32.mrb[0].mxu0
        %v1077 = vadd.f32 0.0, %v1076
        %v1078 = vpop.f32.mrb[0].mxu0
        %1079 = vmatprep.mubr.bf16.mxu0 %v924
        %1080 = vmatmul.mubr.bf16.gmra.mrb[0].mxu0 %v923
        %v1081 = vpop.f32.mrb[0].mxu0
        %v1082 = vadd.f32 0.0, %v1081
        %v1083 = vpop.f32.mrb[0].mxu0
        %v1084 = vpop.f32.mrb[0].mxu0
        %v1085 = vadd.f32 0.0, %v1084
        %v1086 = vpop.f32.mrb[0].mxu0
        %1087 = vmatprep.mubr.bf16.mxu0 %v926
        %1088 = vmatmul.mubr.bf16.gmra.mrb[0].mxu0 %v925
        %v1089 = vpop.f32.mrb[0].mxu0
        %v1090 = vadd.f32 0.0, %v1089
        %v1091 = vpop.f32.mrb[0].mxu0
        %v1092 = vpop.f32.mrb[0].mxu0
        %v1093 = vadd.f32 0.0, %v1092
        %v1094 = vpop.f32.mrb[0].mxu0
        %1095 = vmatprep.mubr.bf16.mxu0 %v928
        %1096 = vmatmul.mubr.bf16.gmra.mrb[0].mxu0 %v927
        %v1097 = vpop.f32.mrb[0].mxu0
        %v1098 = vadd.f32 0.0, %v1097
        %v1099 = vpop.f32.mrb[0].mxu0
        %v1100 = vpop.f32.mrb[0].mxu0
        %v1101 = vadd.f32 0.0, %v1100
        %v1102 = vpop.f32.mrb[0].mxu0
        %1103 = vmatprep.mubr.bf16.mxu0 %v930
        %1104 = vmatmul.mubr.bf16.gmra.mrb[0].mxu0 %v929
        %v1105 = vpop.f32.mrb[0].mxu0
        %v1106 = vadd.f32 0.0, %v1105
        %v1107 = vpop.f32.mrb[0].mxu0
        %v1108 = vpop.f32.mrb[0].mxu0
        %v1109 = vadd.f32 0.0, %v1108
        %v1110 = vpop.f32.mrb[0].mxu0
        %1111 = vmatprep.mubr.bf16.mxu0 %v932
        %1112 = vmatmul.mubr.bf16.gmra.mrb[0].mxu0 %v931
        %v1113 = vpop.f32.mrb[0].mxu0
        %v1114 = vadd.f32 0.0, %v1113
        %v1115 = vpop.f32.mrb[0].mxu0
        %v1116 = vpop.f32.mrb[0].mxu0
        %v1117 = vadd.f32 0.0, %v1116
        %v1118 = vpop.f32.mrb[0].mxu0
        %1119 = vmatprep.mubr.bf16.mxu0 %v934
        %1120 = vmatmul.mubr.bf16.gmra.mrb[0].mxu0 %v933
        %v1121 = vpop.f32.mrb[0].mxu0
        %v1122 = vadd.f32 0.0, %v1121
        %v1123 = vpop.f32.mrb[0].mxu0
        %v1124 = vpop.f32.mrb[0].mxu0
        %v1125 = vadd.f32 0.0, %v1124
        %v1126 = vpop.f32.mrb[0].mxu0
        %1127 = vdwg.mxu0
        %v1128 = vadd.f32 %v743, %v1002
        %v1129 = vadd.f32 %v744, %v1005
        %v1130 = vadd.f32 %v745, %v1010
        %v1131 = vadd.f32 %v746, %v1013
        %v1132 = vadd.f32 %v747, %v1018
        %v1133 = vadd.f32 %v748, %v1021
        %v1134 = vadd.f32 %v749, %v1026
        %v1135 = vadd.f32 %v750, %v1029
        %v1136 = vadd.f32 %v751, %v1034
        %v1137 = vadd.f32 %v752, %v1037
        %v1138 = vadd.f32 %v753, %v1042
        %v1139 = vadd.f32 %v754, %v1045
        %v1140 = vadd.f32 %v755, %v1050
        %v1141 = vadd.f32 %v756, %v1053
        %v1142 = vadd.f32 %v757, %v1058
        %v1143 = vadd.f32 %v758, %v1061
        %v1144 = vadd.f32 %v759, %v1066
        %v1145 = vadd.f32 %v760, %v1069
        %v1146 = vadd.f32 %v761, %v1074
        %v1147 = vadd.f32 %v762, %v1077
        %v1148 = vadd.f32 %v763, %v1082
        %v1149 = vadd.f32 %v764, %v1085
        %v1150 = vadd.f32 %v765, %v1090
        %v1151 = vadd.f32 %v766, %v1093
        %v1152 = vadd.f32 %v767, %v1098
        %v1153 = vadd.f32 %v768, %v1101
        %v1154 = vadd.f32 %v769, %v1106
        %v1155 = vadd.f32 %v770, %v1109
        %v1156 = vadd.f32 %v771, %v1114
        %v1157 = vadd.f32 %v772, %v1117
        %v1158 = vadd.f32 %v773, %v1122
        %v1159 = vadd.f32 %v774, %v1125
        %vm1160 = vcmask 130048
        %1161 = vst.msk [vmem:[#allocation2] sm:$0xff] %vm1160, %v1128
        %1162 = vst.msk [vmem:[#allocation2 + $0x8] sm:$0xff] %vm1160, %v1129
        %1163 = vst.msk [vmem:[#allocation2 + $0x10] sm:$0xff] %vm1160, %v1130
        %1164 = vst.msk [vmem:[#allocation2 + $0x18] sm:$0xff] %vm1160, %v1131
        %1165 = vst.msk [vmem:[#allocation2 + $0x20] sm:$0xff] %vm1160, %v1132
        %1166 = vst.msk [vmem:[#allocation2 + $0x28] sm:$0xff] %vm1160, %v1133
        %1167 = vst.msk [vmem:[#allocation2 + $0x30] sm:$0xff] %vm1160, %v1134
        %1168 = vst.msk [vmem:[#allocation2 + $0x38] sm:$0xff] %vm1160, %v1135
        %1169 = vst.msk [vmem:[#allocation2 + $0x40] sm:$0xff] %vm1160, %v1136
        %1170 = vst.msk [vmem:[#allocation2 + $0x48] sm:$0xff] %vm1160, %v1137
        %1171 = vst.msk [vmem:[#allocation2 + $0x50] sm:$0xff] %vm1160, %v1138
        %1172 = vst.msk [vmem:[#allocation2 + $0x58] sm:$0xff] %vm1160, %v1139
        %1173 = vst.msk [vmem:[#allocation2 + $0x60] sm:$0xff] %vm1160, %v1140
        %1174 = vst.msk [vmem:[#allocation2 + $0x68] sm:$0xff] %vm1160, %v1141
        %1175 = vst.msk [vmem:[#allocation2 + $0x70] sm:$0xff] %vm1160, %v1142
        %1176 = vst.msk [vmem:[#allocation2 + $0x78] sm:$0xff] %vm1160, %v1143
        %1177 = vst.msk [vmem:[#allocation2 + $0x80] sm:$0xff] %vm1160, %v1144
        %1178 = vst.msk [vmem:[#allocation2 + $0x88] sm:$0xff] %vm1160, %v1145
        %1179 = vst.msk [vmem:[#allocation2 + $0x90] sm:$0xff] %vm1160, %v1146
        %1180 = vst.msk [vmem:[#allocation2 + $0x98] sm:$0xff] %vm1160, %v1147
        %1181 = vst.msk [vmem:[#allocation2 + $0xa0] sm:$0xff] %vm1160, %v1148
        %1182 = vst.msk [vmem:[#allocation2 + $0xa8] sm:$0xff] %vm1160, %v1149
        %1183 = vst.msk [vmem:[#allocation2 + $0xb0] sm:$0xff] %vm1160, %v1150
        %1184 = vst.msk [vmem:[#allocation2 + $0xb8] sm:$0xff] %vm1160, %v1151
        %1185 = vst.msk [vmem:[#allocation2 + $0xc0] sm:$0xff] %vm1160, %v1152
        %1186 = vst.msk [vmem:[#allocation2 + $0xc8] sm:$0xff] %vm1160, %v1153
        %1187 = vst.msk [vmem:[#allocation2 + $0xd0] sm:$0xff] %vm1160, %v1154
        %1188 = vst.msk [vmem:[#allocation2 + $0xd8] sm:$0xff] %vm1160, %v1155
        %1189 = vst.msk [vmem:[#allocation2 + $0xe0] sm:$0xff] %vm1160, %v1156
        %1190 = vst.msk [vmem:[#allocation2 + $0xe8] sm:$0xff] %vm1160, %v1157
        %1191 = vst.msk [vmem:[#allocation2 + $0xf0] sm:$0xff] %vm1160, %v1158
        %1192 = vst.msk [vmem:[#allocation2 + $0xf8] sm:$0xff] %vm1160, %v1159
        %p1193 = scmp.eq.s32.totalorder %s21, 1
        // Predicated region
        $region83: #{gcn_forward.2} parent=73 // pred_check
          %p1194 = pneg %p1193
        $region84: #{gcn_forward.2} parent=73 // pred_check_branch
          %1196 = sbr.rel (%p1194) target = $region86
        $region85: #{gcn_forward.2} parent=73 // pred_region
          %v1197 = vld [vmem:[#allocation2] sm:$0xff]
          %v1198 = vld [vmem:[#allocation2 + $0x8] sm:$0xff]
          %v1199 = vld [vmem:[#allocation2 + $0x10] sm:$0xff]
          %v1200 = vld [vmem:[#allocation2 + $0x18] sm:$0xff]
          %v1201 = vld [vmem:[#allocation2 + $0x20] sm:$0xff]
          %v1202 = vld [vmem:[#allocation2 + $0x28] sm:$0xff]
          %v1203 = vld [vmem:[#allocation2 + $0x30] sm:$0xff]
          %v1204 = vld [vmem:[#allocation2 + $0x38] sm:$0xff]
          %v1205 = vld [vmem:[#allocation2 + $0x40] sm:$0xff]
          %v1206 = vld [vmem:[#allocation2 + $0x48] sm:$0xff]
          %v1207 = vld [vmem:[#allocation2 + $0x50] sm:$0xff]
          %v1208 = vld [vmem:[#allocation2 + $0x58] sm:$0xff]
          %v1209 = vld [vmem:[#allocation2 + $0x60] sm:$0xff]
          %v1210 = vld [vmem:[#allocation2 + $0x68] sm:$0xff]
          %v1211 = vld [vmem:[#allocation2 + $0x70] sm:$0xff]
          %v1212 = vld [vmem:[#allocation2 + $0x78] sm:$0xff]
          %v1213 = vld [vmem:[#allocation2 + $0x80] sm:$0xff]
          %v1214 = vld [vmem:[#allocation2 + $0x88] sm:$0xff]
          %v1215 = vld [vmem:[#allocation2 + $0x90] sm:$0xff]
          %v1216 = vld [vmem:[#allocation2 + $0x98] sm:$0xff]
          %v1217 = vld [vmem:[#allocation2 + $0xa0] sm:$0xff]
          %v1218 = vld [vmem:[#allocation2 + $0xa8] sm:$0xff]
          %v1219 = vld [vmem:[#allocation2 + $0xb0] sm:$0xff]
          %v1220 = vld [vmem:[#allocation2 + $0xb8] sm:$0xff]
          %v1221 = vld [vmem:[#allocation2 + $0xc0] sm:$0xff]
          %v1222 = vld [vmem:[#allocation2 + $0xc8] sm:$0xff]
          %v1223 = vld [vmem:[#allocation2 + $0xd0] sm:$0xff]
          %v1224 = vld [vmem:[#allocation2 + $0xd8] sm:$0xff]
          %v1225 = vld [vmem:[#allocation2 + $0xe0] sm:$0xff]
          %v1226 = vld [vmem:[#allocation2 + $0xe8] sm:$0xff]
          %v1227 = vld [vmem:[#allocation2 + $0xf0] sm:$0xff]
          %v1228 = vld [vmem:[#allocation2 + $0xf8] sm:$0xff]
          %v1229 = vld [vmem:[%s3] sm:$0x1]
          %v1231 = vlaneseq
          %v1232 = vshrl.u32 %v1231, 7
          %v1233 = vsub.s32 0, %v1232
          %v1234 = vrot.slane %v1229, %v1233
          %v1236 = vadd.f32 %v1197, %v1234
          %v1237 = vadd.f32 %v1198, %v1234
          %v1238 = vadd.f32 %v1199, %v1234
          %v1239 = vadd.f32 %v1200, %v1234
          %v1240 = vadd.f32 %v1201, %v1234
          %v1241 = vadd.f32 %v1202, %v1234
          %v1242 = vadd.f32 %v1203, %v1234
          %v1243 = vadd.f32 %v1204, %v1234
          %v1244 = vadd.f32 %v1205, %v1234
          %v1245 = vadd.f32 %v1206, %v1234
          %v1246 = vadd.f32 %v1207, %v1234
          %v1247 = vadd.f32 %v1208, %v1234
          %v1248 = vadd.f32 %v1209, %v1234
          %v1249 = vadd.f32 %v1210, %v1234
          %v1250 = vadd.f32 %v1211, %v1234
          %v1251 = vadd.f32 %v1212, %v1234
          %v1252 = vadd.f32 %v1213, %v1234
          %v1253 = vadd.f32 %v1214, %v1234
          %v1254 = vadd.f32 %v1215, %v1234
          %v1255 = vadd.f32 %v1216, %v1234
          %v1256 = vadd.f32 %v1217, %v1234
          %v1257 = vadd.f32 %v1218, %v1234
          %v1258 = vadd.f32 %v1219, %v1234
          %v1259 = vadd.f32 %v1220, %v1234
          %v1260 = vadd.f32 %v1221, %v1234
          %v1261 = vadd.f32 %v1222, %v1234
          %v1262 = vadd.f32 %v1223, %v1234
          %v1263 = vadd.f32 %v1224, %v1234
          %v1264 = vadd.f32 %v1225, %v1234
          %v1265 = vadd.f32 %v1226, %v1234
          %v1266 = vadd.f32 %v1227, %v1234
          %v1267 = vadd.f32 %v1228, %v1234
          %v1268 = vmax.f32 %v1236, 0.0
          %v1269 = vmax.f32 %v1237, 0.0
          %v1270 = vmax.f32 %v1238, 0.0
          %v1271 = vmax.f32 %v1239, 0.0
          %v1272 = vmax.f32 %v1240, 0.0
          %v1273 = vmax.f32 %v1241, 0.0
          %v1274 = vmax.f32 %v1242, 0.0
          %v1275 = vmax.f32 %v1243, 0.0
          %v1276 = vmax.f32 %v1244, 0.0
          %v1277 = vmax.f32 %v1245, 0.0
          %v1278 = vmax.f32 %v1246, 0.0
          %v1279 = vmax.f32 %v1247, 0.0
          %v1280 = vmax.f32 %v1248, 0.0
          %v1281 = vmax.f32 %v1249, 0.0
          %v1282 = vmax.f32 %v1250, 0.0
          %v1283 = vmax.f32 %v1251, 0.0
          %v1284 = vmax.f32 %v1252, 0.0
          %v1285 = vmax.f32 %v1253, 0.0
          %v1286 = vmax.f32 %v1254, 0.0
          %v1287 = vmax.f32 %v1255, 0.0
          %v1288 = vmax.f32 %v1256, 0.0
          %v1289 = vmax.f32 %v1257, 0.0
          %v1290 = vmax.f32 %v1258, 0.0
          %v1291 = vmax.f32 %v1259, 0.0
          %v1292 = vmax.f32 %v1260, 0.0
          %v1293 = vmax.f32 %v1261, 0.0
          %v1294 = vmax.f32 %v1262, 0.0
          %v1295 = vmax.f32 %v1263, 0.0
          %v1296 = vmax.f32 %v1264, 0.0
          %v1297 = vmax.f32 %v1265, 0.0
          %v1298 = vmax.f32 %v1266, 0.0
          %v1299 = vmax.f32 %v1267, 0.0
          %v1300 = vld [vmem:[%s4] sm:$0x1]
          %v1302 = vlaneseq
          %v1303 = vshrl.u32 %v1302, 7
          %v1304 = vsub.s32 0, %v1303
          %v1305 = vrot.slane %v1300, %v1304
          %v1307 = vmul.f32 %v1268, %v1305
          %v1308 = vmul.f32 %v1269, %v1305
          %v1309 = vmul.f32 %v1270, %v1305
          %v1310 = vmul.f32 %v1271, %v1305
          %v1311 = vmul.f32 %v1272, %v1305
          %v1312 = vmul.f32 %v1273, %v1305
          %v1313 = vmul.f32 %v1274, %v1305
          %v1314 = vmul.f32 %v1275, %v1305
          %v1315 = vmul.f32 %v1276, %v1305
          %v1316 = vmul.f32 %v1277, %v1305
          %v1317 = vmul.f32 %v1278, %v1305
          %v1318 = vmul.f32 %v1279, %v1305
          %v1319 = vmul.f32 %v1280, %v1305
          %v1320 = vmul.f32 %v1281, %v1305
          %v1321 = vmul.f32 %v1282, %v1305
          %v1322 = vmul.f32 %v1283, %v1305
          %v1323 = vmul.f32 %v1284, %v1305
          %v1324 = vmul.f32 %v1285, %v1305
          %v1325 = vmul.f32 %v1286, %v1305
          %v1326 = vmul.f32 %v1287, %v1305
          %v1327 = vmul.f32 %v1288, %v1305
          %v1328 = vmul.f32 %v1289, %v1305
          %v1329 = vmul.f32 %v1290, %v1305
          %v1330 = vmul.f32 %v1291, %v1305
          %v1331 = vmul.f32 %v1292, %v1305
          %v1332 = vmul.f32 %v1293, %v1305
          %v1333 = vmul.f32 %v1294, %v1305
          %v1334 = vmul.f32 %v1295, %v1305
          %v1335 = vmul.f32 %v1296, %v1305
          %v1336 = vmul.f32 %v1297, %v1305
          %v1337 = vmul.f32 %v1298, %v1305
          %v1338 = vmul.f32 %v1299, %v1305
          %v1339 = vsel %vm1160, %v1307, 0.0
          %1340 = vadd.xlane.f32.xlu0 %v1339
          %v1341 = vpop.xlane.xlu0 %1340
          %v1342 = vsel %vm1160, %v1308, 0.0
          %1343 = vadd.xlane.f32.xlu0 %v1342
          %v1344 = vpop.xlane.xlu0 %1343
          %v1345 = vsel %vm1160, %v1309, 0.0
          %1346 = vadd.xlane.f32.xlu0 %v1345
          %v1347 = vpop.xlane.xlu0 %1346
          %v1348 = vsel %vm1160, %v1310, 0.0
          %1349 = vadd.xlane.f32.xlu0 %v1348
          %v1350 = vpop.xlane.xlu0 %1349
          %v1351 = vsel %vm1160, %v1311, 0.0
          %1352 = vadd.xlane.f32.xlu0 %v1351
          %v1353 = vpop.xlane.xlu0 %1352
          %v1354 = vsel %vm1160, %v1312, 0.0
          %1355 = vadd.xlane.f32.xlu0 %v1354
          %v1356 = vpop.xlane.xlu0 %1355
          %v1357 = vsel %vm1160, %v1313, 0.0
          %1358 = vadd.xlane.f32.xlu0 %v1357
          %v1359 = vpop.xlane.xlu0 %1358
          %v1360 = vsel %vm1160, %v1314, 0.0
          %1361 = vadd.xlane.f32.xlu0 %v1360
          %v1362 = vpop.xlane.xlu0 %1361
          %v1363 = vsel %vm1160, %v1315, 0.0
          %1364 = vadd.xlane.f32.xlu0 %v1363
          %v1365 = vpop.xlane.xlu0 %1364
          %v1366 = vsel %vm1160, %v1316, 0.0
          %1367 = vadd.xlane.f32.xlu0 %v1366
          %v1368 = vpop.xlane.xlu0 %1367
          %v1369 = vsel %vm1160, %v1317, 0.0
          %1370 = vadd.xlane.f32.xlu0 %v1369
          %v1371 = vpop.xlane.xlu0 %1370
          %v1372 = vsel %vm1160, %v1318, 0.0
          %1373 = vadd.xlane.f32.xlu0 %v1372
          %v1374 = vpop.xlane.xlu0 %1373
          %v1375 = vsel %vm1160, %v1319, 0.0
          %1376 = vadd.xlane.f32.xlu0 %v1375
          %v1377 = vpop.xlane.xlu0 %1376
          %v1378 = vsel %vm1160, %v1320, 0.0
          %1379 = vadd.xlane.f32.xlu0 %v1378
          %v1380 = vpop.xlane.xlu0 %1379
          %v1381 = vsel %vm1160, %v1321, 0.0
          %1382 = vadd.xlane.f32.xlu0 %v1381
          %v1383 = vpop.xlane.xlu0 %1382
          %v1384 = vsel %vm1160, %v1322, 0.0
          %1385 = vadd.xlane.f32.xlu0 %v1384
          %v1386 = vpop.xlane.xlu0 %1385
          %v1387 = vsel %vm1160, %v1323, 0.0
          %1388 = vadd.xlane.f32.xlu0 %v1387
          %v1389 = vpop.xlane.xlu0 %1388
          %v1390 = vsel %vm1160, %v1324, 0.0
          %1391 = vadd.xlane.f32.xlu0 %v1390
          %v1392 = vpop.xlane.xlu0 %1391
          %v1393 = vsel %vm1160, %v1325, 0.0
          %1394 = vadd.xlane.f32.xlu0 %v1393
          %v1395 = vpop.xlane.xlu0 %1394
          %v1396 = vsel %vm1160, %v1326, 0.0
          %1397 = vadd.xlane.f32.xlu0 %v1396
          %v1398 = vpop.xlane.xlu0 %1397
          %v1399 = vsel %vm1160, %v1327, 0.0
          %1400 = vadd.xlane.f32.xlu0 %v1399
          %v1401 = vpop.xlane.xlu0 %1400
          %v1402 = vsel %vm1160, %v1328, 0.0
          %1403 = vadd.xlane.f32.xlu0 %v1402
          %v1404 = vpop.xlane.xlu0 %1403
          %v1405 = vsel %vm1160, %v1329, 0.0
          %1406 = vadd.xlane.f32.xlu0 %v1405
          %v1407 = vpop.xlane.xlu0 %1406
          %v1408 = vsel %vm1160, %v1330, 0.0
          %1409 = vadd.xlane.f32.xlu0 %v1408
          %v1410 = vpop.xlane.xlu0 %1409
          %v1411 = vsel %vm1160, %v1331, 0.0
          %1412 = vadd.xlane.f32.xlu0 %v1411
          %v1413 = vpop.xlane.xlu0 %1412
          %v1414 = vsel %vm1160, %v1332, 0.0
          %1415 = vadd.xlane.f32.xlu0 %v1414
          %v1416 = vpop.xlane.xlu0 %1415
          %v1417 = vsel %vm1160, %v1333, 0.0
          %1418 = vadd.xlane.f32.xlu0 %v1417
          %v1419 = vpop.xlane.xlu0 %1418
          %v1420 = vsel %vm1160, %v1334, 0.0
          %1421 = vadd.xlane.f32.xlu0 %v1420
          %v1422 = vpop.xlane.xlu0 %1421
          %v1423 = vsel %vm1160, %v1335, 0.0
          %1424 = vadd.xlane.f32.xlu0 %v1423
          %v1425 = vpop.xlane.xlu0 %1424
          %v1426 = vsel %vm1160, %v1336, 0.0
          %1427 = vadd.xlane.f32.xlu0 %v1426
          %v1428 = vpop.xlane.xlu0 %1427
          %v1429 = vsel %vm1160, %v1337, 0.0
          %1430 = vadd.xlane.f32.xlu0 %v1429
          %v1431 = vpop.xlane.xlu0 %1430
          %v1432 = vsel %vm1160, %v1338, 0.0
          %1433 = vadd.xlane.f32.xlu0 %v1432
          %v1434 = vpop.xlane.xlu0 %1433
          %vm1435 = vcmask 7168
          %1436 = vst.msk [vmem:[%s424] sm:$0xff] %vm1435, %v1341
          %1437 = vst.msk [vmem:[%s424 + $0x8] sm:$0xff] %vm1435, %v1344
          %1438 = vst.msk [vmem:[%s424 + $0x10] sm:$0xff] %vm1435, %v1347
          %1439 = vst.msk [vmem:[%s424 + $0x18] sm:$0xff] %vm1435, %v1350
          %1440 = vst.msk [vmem:[%s424 + $0x20] sm:$0xff] %vm1435, %v1353
          %1441 = vst.msk [vmem:[%s424 + $0x28] sm:$0xff] %vm1435, %v1356
          %1442 = vst.msk [vmem:[%s424 + $0x30] sm:$0xff] %vm1435, %v1359
          %1443 = vst.msk [vmem:[%s424 + $0x38] sm:$0xff] %vm1435, %v1362
          %1444 = vst.msk [vmem:[%s424 + $0x40] sm:$0xff] %vm1435, %v1365
          %1445 = vst.msk [vmem:[%s424 + $0x48] sm:$0xff] %vm1435, %v1368
          %1446 = vst.msk [vmem:[%s424 + $0x50] sm:$0xff] %vm1435, %v1371
          %1447 = vst.msk [vmem:[%s424 + $0x58] sm:$0xff] %vm1435, %v1374
          %1448 = vst.msk [vmem:[%s424 + $0x60] sm:$0xff] %vm1435, %v1377
          %1449 = vst.msk [vmem:[%s424 + $0x68] sm:$0xff] %vm1435, %v1380
          %1450 = vst.msk [vmem:[%s424 + $0x70] sm:$0xff] %vm1435, %v1383
          %1451 = vst.msk [vmem:[%s424 + $0x78] sm:$0xff] %vm1435, %v1386
          %1452 = vst.msk [vmem:[%s424 + $0x80] sm:$0xff] %vm1435, %v1389
          %1453 = vst.msk [vmem:[%s424 + $0x88] sm:$0xff] %vm1435, %v1392
          %1454 = vst.msk [vmem:[%s424 + $0x90] sm:$0xff] %vm1435, %v1395
          %1455 = vst.msk [vmem:[%s424 + $0x98] sm:$0xff] %vm1435, %v1398
          %1456 = vst.msk [vmem:[%s424 + $0xa0] sm:$0xff] %vm1435, %v1401
          %1457 = vst.msk [vmem:[%s424 + $0xa8] sm:$0xff] %vm1435, %v1404
          %1458 = vst.msk [vmem:[%s424 + $0xb0] sm:$0xff] %vm1435, %v1407
          %1459 = vst.msk [vmem:[%s424 + $0xb8] sm:$0xff] %vm1435, %v1410
          %1460 = vst.msk [vmem:[%s424 + $0xc0] sm:$0xff] %vm1435, %v1413
          %1461 = vst.msk [vmem:[%s424 + $0xc8] sm:$0xff] %vm1435, %v1416
          %1462 = vst.msk [vmem:[%s424 + $0xd0] sm:$0xff] %vm1435, %v1419
          %1463 = vst.msk [vmem:[%s424 + $0xd8] sm:$0xff] %vm1435, %v1422
          %1464 = vst.msk [vmem:[%s424 + $0xe0] sm:$0xff] %vm1435, %v1425
          %1465 = vst.msk [vmem:[%s424 + $0xe8] sm:$0xff] %vm1435, %v1428
          %1466 = vst.msk [vmem:[%s424 + $0xf0] sm:$0xff] %vm1435, %v1431
          %1467 = vst.msk [vmem:[%s424 + $0xf8] sm:$0xff] %vm1435, %v1434
        $region86: #{gcn_forward.2} parent=73 // pred_fallthru
          _
        %s1468 = smul.u32 32, %s20
        %p1469 = scmp.lt.s32.totalorder %s1468, 63
        %s1470 = scalar_select %p1469, %s1468, 63
        %s1471 = smul.addr %s1470, 8
        %s1472 = scalar_lea.vmem %s5, %s1471
        // Predicated region
        $region87: #{gcn_forward.2} parent=73 // pred_check
          %p1473 = pneg %p163
        $region88: #{gcn_forward.2} parent=73 // pred_check_branch
          %1475 = sbr.rel (%p1473) target = $region90
        $region89: #{gcn_forward.2} parent=73 // pred_region
          %s1476 = smul.u32 32, %s20
        $region90: #{gcn_forward.2} parent=73 // pred_fallthru
          _
      $region74: #{gcn_forward.2} parent=5 // pred_fallthru
        _
      %p1477 = scmp.le.s32.totalorder 2, %s11
      // Predicated region
      $region91: #{gcn_forward.2} parent=5 // pred_check
        %p1478 = pneg %p1477
      $region92: #{gcn_forward.2} parent=5 // pred_check_branch
        %1480 = sbr.rel (%p1478) target = $region94
      $region93: #{gcn_forward.2} parent=5 // pred_region
        %s1481 = ssub.s32 %s11, 2
        // Predicated region
        $region95: #{gcn_forward.2} parent=93 // pred_check
          %p1482 = pneg %p169
        $region96: #{gcn_forward.2} parent=93 // pred_check_branch
          %1484 = sbr.rel (%p1482) target = $region98
        $region97: #{gcn_forward.2} parent=93 // pred_region
          %s1485 = smul.u32 32, %s22
          %p1486 = scmp.lt.s32.totalorder %s1485, 63
          %s1487 = scalar_select %p1486, %s1485, 63
          %s1488 = smul.addr %s1487, 8
          %s1489 = scalar_lea.vmem %s5, %s1488
        $region98: #{gcn_forward.2} parent=93 // pred_fallthru
          _
      $region94: #{gcn_forward.2} parent=5 // pred_fallthru
        _
    $region6: #{gcn_forward.2} parent=1 // loop_footer
      %s15 = sadd.s32 1, %s11
    $region7: #{gcn_forward.2} parent=1 // loop_footer_branch
      %10 = sbr.rel target = $region3
    $region8: #{gcn_forward.2} parent=1 // loop_exit
      _

</llo_original>
